<compile_context>
chip_gen: v7x
topology: tpu7x:2x2x1
jax: 0.10.0
libtpu: 0.0.40
codegen_flags: <defaults>
</compile_context>

<pallas_src>
import math

import jax
import jax.numpy as jnp
from jax.experimental import pallas as pl
from jax.experimental.pallas import tpu as pltpu


# -----------------------------------------------------------------------------
# Per-TPU-generation tuning knobs (reviewer: v5e narrower cout tile, v7x smaller
# accumulator + 64 MiB VMEM, v6e can afford big resident tiles).
# -----------------------------------------------------------------------------
def _tpu_plan():
    kind = ""
    try:
        kind = jax.devices()[0].device_kind.lower()
    except Exception:
        pass
    if "v5 lite" in kind or "v5e" in kind or "v5lite" in kind:
        # 128-wide MXU + single vst slot -> cout_t=128; 128 MiB physical VMEM.
        return {"cout_cap": 128, "acc_elems": 256 * 1024, "vmem": 96 * 2**20}
    if "v7" in kind:
        # 64 MiB VMEM, MRB accumulate -> smaller live accumulator, tight limit.
        return {"cout_cap": 256, "acc_elems": 128 * 1024, "vmem": 58 * 2**20}
    # v6e / default: 256-deep MXU, 128 MiB physical VMEM.
    return {"cout_cap": 256, "acc_elems": 256 * 1024, "vmem": 96 * 2**20}


_PLAN = _tpu_plan()


def _pick_tile(lout, cap):
    """Largest multiple-of-8 divisor of lout that is <= cap (or lout itself)."""
    if lout <= cap:
        return lout
    start = cap - cap % 8
    for m in range(start, 7, -8):
        if lout % m == 0:
            return m
    # Pathological shape (no suitable divisor): fall back to the whole plane.
    return lout


# -----------------------------------------------------------------------------
# Conv3d(3x3x3, padding='same') + bias (+ ReLU), generic channel counts.
#
# Glue: pad D/H/W by 1, fold the 3 kw taps onto the channel axis (partial
# im2col -> K = 3*Cin), flatten (H+2, W) into one plane axis.  The kernel sees
# the three consecutive depth planes (same array passed three times with
# shifted index maps, block index independent of co/t so the plane stays
# resident), the full (3, 3, 3*Cin, cout_t) weight block (resident per co) and
# computes one (tm, cout_t) output tile per grid step with 9 K-deep MXU dots
# accumulated into a local f32 value.  Tap offsets are t*tm + kh*W, both
# multiples of gcd(tm, W) -> sublane-aligned, and the output needs no crop.
# -----------------------------------------------------------------------------
def conv3d_same_relu(x, w, b, apply_relu=True):
    N, D, H, W, Cin = x.shape
    Cout = w.shape[-1]
    K = 3 * Cin                      # kw folded into the contraction depth
    Lp = (H + 2) * W                 # flattened padded plane
    Lout = H * W                     # flattened output plane (no garbage cols)

    cout_t = min(Cout, _PLAN["cout_cap"])
    n_co = Cout // cout_t
    tm = _pick_tile(Lout, max(256, _PLAN["acc_elems"] // cout_t))
    n_t = Lout // tm
    align = math.gcd(tm, W)

    xp = jnp.pad(x.astype(jnp.bfloat16),
                 ((0, 0), (1, 1), (1, 1), (1, 1), (0, 0)))
    # partial im2col over kw: (N, D+2, H+2, W, 3*Cin), then a free reshape.
    xw = jnp.concatenate([xp[:, :, :, kw:kw + W, :] for kw in range(3)],
                         axis=-1)
    xf = xw.reshape(N, D + 2, Lp, K)
    wr = w.astype(jnp.bfloat16).reshape(3, 3, K, Cout)   # [kd, kh, kw*Cin+c, o]
    b2 = b.astype(jnp.float32).reshape(1, Cout)

    def kernel(x0_ref, x1_ref, x2_ref, w_ref, b_ref, o_ref):
        t = pl.program_id(3)
        xs = (x0_ref, x1_ref, x2_ref)
        acc = jnp.zeros((tm, cout_t), jnp.float32)
        for kd in range(3):                       # 9 dots, K = 3*Cin each
            for kh in range(3):
                off = t * tm + kh * W
                if align > 1:
                    off = pl.multiple_of(off, align)
                patch = xs[kd][0, 0, pl.ds(off, tm), :]          # (tm, K) bf16
                acc = acc + jnp.dot(patch, w_ref[kd, kh],
                                    preferred_element_type=jnp.float32)
        y = acc + b_ref[...]
        if apply_relu:
            y = jnp.maximum(y, 0.0)
        o_ref[0, 0] = y.astype(o_ref.dtype)                      # single store

    def x_spec(kd):
        return pl.BlockSpec((1, 1, Lp, K),
                            lambda n, co, d, t, _kd=kd: (n, d + _kd, 0, 0))

    out = pl.pallas_call(
        kernel,
        out_shape=jax.ShapeDtypeStruct((N, D, Lout, Cout), jnp.bfloat16),
        grid_spec=pltpu.PrefetchScalarGridSpec(
            num_scalar_prefetch=0,
            # N outermost + "parallel" -> megacore split lands on the batch.
            grid=(N, n_co, D, n_t),
            in_specs=[x_spec(0), x_spec(1), x_spec(2),
                      pl.BlockSpec((3, 3, K, cout_t),
                                   lambda n, co, d, t: (0, 0, 0, co)),
                      pl.BlockSpec((1, cout_t),
                                   lambda n, co, d, t: (0, co))],
            out_specs=pl.BlockSpec((1, 1, tm, cout_t),
                                   lambda n, co, d, t: (n, d, t, co)),
        ),
        compiler_params=pltpu.CompilerParams(
            dimension_semantics=("parallel", "parallel", "arbitrary", "arbitrary"),
            vmem_limit_bytes=_PLAN["vmem"]),
    )(xf, xf, xf, wr, b2)

    return out.reshape(N, D, H, W, Cout)


# -----------------------------------------------------------------------------
# First conv (tiny Cin=3): full 27-tap im2col in glue -> one dense matmul per
# tile; the K dimension is zero-padded 81 -> 128 for aligned DMA / full lanes.
# -----------------------------------------------------------------------------
def conv3d_first_relu(x, w, b):
    N, D, H, W, Cin = x.shape
    Cout = w.shape[-1]
    K = 27 * Cin
    KP = 128
    xp = jnp.pad(x.astype(jnp.bfloat16),
                 ((0, 0), (1, 1), (1, 1), (1, 1), (0, 0)))
    taps = [xp[:, kd:kd + D, kh:kh + H, kw:kw + W, :]
            for kd in range(3) for kh in range(3) for kw in range(3)]
    patches = jnp.concatenate(taps, axis=-1)                 # (N, D, H, W, 81)
    patches = jnp.pad(patches, ((0, 0),) * 4 + ((0, KP - K),))
    patches = patches.reshape(N, D, H * W, KP)
    w2 = jnp.pad(w.astype(jnp.bfloat16).reshape(K, Cout), ((0, KP - K), (0, 0)))
    b2 = b.astype(jnp.float32).reshape(1, Cout)

    L = H * W
    tm = _pick_tile(L, 4096)
    n_t = L // tm

    def kernel(x_ref, w_ref, b_ref, o_ref):
        y = jnp.dot(x_ref[0, 0], w_ref[...],
                    preferred_element_type=jnp.float32) + b_ref[...]
        o_ref[0, 0] = jnp.maximum(y, 0.0).astype(o_ref.dtype)

    out = pl.pallas_call(
        kernel,
        out_shape=jax.ShapeDtypeStruct((N, D, L, Cout), jnp.bfloat16),
        grid_spec=pltpu.PrefetchScalarGridSpec(
            num_scalar_prefetch=0,
            grid=(N, D, n_t),
            in_specs=[pl.BlockSpec((1, 1, tm, KP), lambda n, d, t: (n, d, t, 0)),
                      pl.BlockSpec((KP, Cout), lambda n, d, t: (0, 0)),
                      pl.BlockSpec((1, Cout), lambda n, d, t: (0, 0))],
            out_specs=pl.BlockSpec((1, 1, tm, Cout), lambda n, d, t: (n, d, t, 0)),
        ),
        compiler_params=pltpu.CompilerParams(
            dimension_semantics=("parallel", "parallel", "arbitrary"),
            vmem_limit_bytes=_PLAN["vmem"]),
    )(patches, w2, b2)
    return out.reshape(N, D, H, W, Cout)


# -----------------------------------------------------------------------------
# MaxPool3d with kernel (1, k, k), stride (s_d, k, k); k | H, k | W.
# Glue folds (W, C) -> (Wo, k*C) (free reshape); the kernel processes a whole
# plane per grid step with vectorized elementwise maxima (mem-bound).
# -----------------------------------------------------------------------------
def maxpool3d(x, k, s_d):
    N, D, H, W, C = x.shape
    Do = (D - 1) // s_d + 1
    Ho, Wo = H // k, W // k
    xr = x.reshape(N, D, Ho, k, Wo, k * C)

    def kernel(x_ref, o_ref):
        m = x_ref[0, 0, :, 0, :, :]                  # (Ho, Wo, k*C)
        for i in range(1, k):                        # pool the k window rows
            m = jnp.maximum(m, x_ref[0, 0, :, i, :, :])
        r = m[:, :, :C]
        for i in range(1, k):                        # pool the k window cols
            r = jnp.maximum(r, m[:, :, i * C:(i + 1) * C])
        o_ref[0, 0] = r

    return pl.pallas_call(
        kernel,
        out_shape=jax.ShapeDtypeStruct((N, Do, Ho, Wo, C), x.dtype),
        grid_spec=pltpu.PrefetchScalarGridSpec(
            num_scalar_prefetch=0,
            grid=(N, Do),
            in_specs=[pl.BlockSpec((1, 1, Ho, k, Wo, k * C),
                                   lambda n, d: (n, d * s_d, 0, 0, 0, 0))],
            out_specs=pl.BlockSpec((1, 1, Ho, Wo, C),
                                   lambda n, d: (n, d, 0, 0, 0)),
        ),
        compiler_params=pltpu.CompilerParams(
            dimension_semantics=("parallel", "parallel")),
    )(xr)


# -----------------------------------------------------------------------------
# Classifier head: fc1 + ReLU + fc2 + ReLU + fc3 + softmax fused in one call
# (all weights ~4.7 MB -> everything resident in VMEM).
# -----------------------------------------------------------------------------
def classifier_head(feat, w1, b1, w2, b2, w3, b3):
    N = feat.shape[0]
    n_class = w3.shape[1]

    def kernel(x_ref, w1_ref, b1_ref, w2_ref, b2_ref, w3_ref, b3_ref, o_ref):
        h = jnp.dot(x_ref[...], w1_ref[...], preferred_element_type=jnp.float32)
        h = jnp.maximum(h + b1_ref[...], 0.0)
        # TODO(synk): train-mode Dropout(p=0.5) would need pltpu.prng_* here.
        h = jnp.dot(h, w2_ref[...], preferred_element_type=jnp.float32)
        h = jnp.maximum(h + b2_ref[...], 0.0)
        y = jnp.dot(h, w3_ref[...], preferred_element_type=jnp.float32) + b3_ref[...]
        m = jnp.max(y, axis=-1, keepdims=True)
        e = jnp.exp(y - m)
        o_ref[...] = (e / jnp.sum(e, axis=-1, keepdims=True)).astype(o_ref.dtype)

    vmem = pl.BlockSpec(memory_space=pltpu.MemorySpace.VMEM)
    return pl.pallas_call(
        kernel,
        out_shape=jax.ShapeDtypeStruct((N, n_class), jnp.float32),
        in_specs=[vmem] * 7,
        out_specs=vmem,
    )(feat.astype(jnp.float32), w1, b1.reshape(1, -1),
      w2, b2.reshape(1, -1), w3, b3.reshape(1, -1))


# -----------------------------------------------------------------------------
# Deterministic parameter construction (He init; eval-mode BN folded; conv
# weights stored bf16, biases + FC params f32).
# -----------------------------------------------------------------------------
def init_params(key, n_class):
    keys = iter(jax.random.split(key, 32))

    def conv_p(cin, cout, bn=False):
        kw_, kb_ = jax.random.split(next(keys))
        std = math.sqrt(2.0 / (27 * cin))
        w = std * jax.random.normal(kw_, (3, 3, 3, cin, cout), jnp.float32)
        b = 0.01 * jax.random.normal(kb_, (cout,), jnp.float32)
        if bn:  # eval-mode BN(gamma=1, beta=0, mean=0, var=1, eps=1e-5) folded in
            s = 1.0 / math.sqrt(1.0 + 1e-5)
            w, b = w * s, b * s
        return w.astype(jnp.bfloat16), b

    def lin_p(fin, fout):
        kw_, kb_ = jax.random.split(next(keys))
        std = math.sqrt(2.0 / fin)
        w = std * jax.random.normal(kw_, (fin, fout), jnp.float32)
        b = 0.01 * jax.random.normal(kb_, (fout,), jnp.float32)
        return w, b

    return {
        "f1": [conv_p(3, 64), conv_p(64, 64), conv_p(64, 128), conv_p(128, 128),
               conv_p(128, 256), conv_p(256, 256), conv_p(256, 256)],
        "f2": [conv_p(256, 512), conv_p(512, 512), conv_p(512, 512)],
        "f3": [conv_p(512, 512), conv_p(512, 512), conv_p(512, 512)],
        "cp1": conv_p(256, 256, bn=True),
        "cp2": conv_p(512, 256, bn=True),
        "cp3": conv_p(512, 256, bn=True),
        "fc1": lin_p(768, 768),
        "fc2": lin_p(768, 768),
        "fc3": lin_p(768, n_class),
    }


# -----------------------------------------------------------------------------
# SE_VGG forward (== Pretrained_conv.forward).  Input is NCDHW like torch.
# -----------------------------------------------------------------------------
def se_vgg_forward(x_ncdhw, p):
    x = jnp.transpose(x_ncdhw, (0, 2, 3, 4, 1))       # -> NDHWC
    N = x.shape[0]

    # extract_feature1
    h = conv3d_first_relu(x, *p["f1"][0])             # 3 -> 64 (im2col, K=128)
    h = conv3d_same_relu(h, *p["f1"][1])
    h = maxpool3d(h, 2, 1)
    h = conv3d_same_relu(h, *p["f1"][2])
    h = conv3d_same_relu(h, *p["f1"][3])
    h = maxpool3d(h, 2, 1)
    h = conv3d_same_relu(h, *p["f1"][4])
    h = conv3d_same_relu(h, *p["f1"][5])
    h = conv3d_same_relu(h, *p["f1"][6])
    feature1 = maxpool3d(h, 2, 1)                     # (N, D, 16, 16, 256)

    # extract_feature2
    h = conv3d_same_relu(feature1, *p["f2"][0])
    h = conv3d_same_relu(h, *p["f2"][1])
    h = conv3d_same_relu(h, *p["f2"][2])
    feature2 = maxpool3d(h, 2, 2)                     # (N, 1, 8, 8, 512)

    # extract_feature3
    h = conv3d_same_relu(feature2, *p["f3"][0])
    h = conv3d_same_relu(h, *p["f3"][1])
    h = conv3d_same_relu(h, *p["f3"][2])
    feature3 = maxpool3d(h, 2, 2)                     # (N, 1, 4, 4, 512)

    # conv_pool / conv_pool2 / conv_pool3  (conv + folded-BN + ReLU + maxpool)
    r1 = maxpool3d(conv3d_same_relu(feature1, *p["cp1"]), 16, 16)
    r2 = maxpool3d(conv3d_same_relu(feature2, *p["cp2"]), 8, 8)
    r3 = maxpool3d(conv3d_same_relu(feature3, *p["cp3"]), 4, 4)

    feat = jnp.concatenate(
        [r1.reshape(N, 256), r2.reshape(N, 256), r3.reshape(N, 256)],
        axis=-1).astype(jnp.float32)                  # (N, 768)

    return classifier_head(feat, *p["fc1"], *p["fc2"], *p["fc3"])


if __name__ == "__main__":
    key = jax.random.PRNGKey(0)
    pkey, xkey, tkey = jax.random.split(key, 3)
    n_class = 5

    # --- small correctness spot-checks of the Pallas primitives -------------
    k1, k2, k3, k4 = jax.random.split(tkey, 4)
    xt = jax.random.normal(k1, (1, 2, 8, 8, 32), jnp.float32)
    wt = (0.1 * jax.random.normal(k2, (3, 3, 3, 32, 64), jnp.float32)).astype(jnp.bfloat16)
    bt = 0.1 * jax.random.normal(k3, (64,), jnp.float32)
    got = conv3d_same_relu(xt, wt, bt).astype(jnp.float32)
    ref = jax.lax.conv_general_dilated(
        xt.astype(jnp.bfloat16).astype(jnp.float32), wt.astype(jnp.float32),
        window_strides=(1, 1, 1), padding="SAME",
        dimension_numbers=("NDHWC", "DHWIO", "NDHWC"))
    ref = jnp.maximum(ref + bt.reshape(1, 1, 1, 1, -1), 0.0)
    assert bool(jnp.allclose(got, ref, atol=5e-2, rtol=5e-2)), \
        float(jnp.max(jnp.abs(got - ref)))

    pt = jax.random.normal(k4, (1, 2, 8, 8, 16), jnp.float32).astype(jnp.bfloat16)
    got_p = maxpool3d(pt, 2, 1)
    ref_p = pt.reshape(1, 2, 4, 2, 4, 2, 16).max(axis=(3, 5))
    assert bool(jnp.all(got_p == ref_p))

    # --- full SE_VGG / Pretrained_conv forward -------------------------------
    params = init_params(pkey, n_class)
    # Spatial 128x128 is forced by the fixed pool kernels + Linear(768);
    # batch=2, depth=2 keep the rest small.
    x = jax.random.normal(xkey, (2, 3, 2, 128, 128), dtype=jnp.float32)  # NCDHW

    fwd = jax.jit(se_vgg_forward)
    out = jax.block_until_ready(fwd(x, params))

    assert out.shape == (2, n_class), out.shape
    assert bool(jnp.all(jnp.isfinite(out)))
    assert bool(jnp.allclose(jnp.sum(out, axis=-1), 1.0, atol=1e-3))
    # NOTE: end-to-end bf16 drift vs an f32 reference is not asserted here
    # (13 stacked bf16 layers); per-primitive numerics are checked above.
    print("KERNEL_OK")
</pallas_src>

<mosaic_0001>
module attributes {stable_mosaic.version = 11 : i64} {
  func.func @kernel(%arg0: i32, %arg1: i32, %arg2: i32, %arg3: i32, %arg4: memref<1x1x80x96xbf16, #tpu.memory_space<vmem>>, %arg5: memref<1x1x80x96xbf16, #tpu.memory_space<vmem>>, %arg6: memref<1x1x80x96xbf16, #tpu.memory_space<vmem>>, %arg7: memref<3x3x96x64xbf16, #tpu.memory_space<vmem>>, %arg8: memref<1x64xf32, #tpu.memory_space<vmem>>, %arg9: memref<1x1x64x64xbf16, #tpu.memory_space<vmem>>) attributes {dimension_semantics = [#tpu.dimension_semantics<parallel>, #tpu.dimension_semantics<parallel>, #tpu.dimension_semantics<arbitrary>, #tpu.dimension_semantics<arbitrary>], iteration_bounds = array<i64: 1, 1, 2, 1>, scalar_prefetch = 0 : i64, scratch_operands = 0 : i64, tpu.core_type = #tpu.core_type<tc>, window_params = [{transform_indices = @transform_0, window_bounds = array<i64: 1, 1, 80, 96>}, {transform_indices = @transform_1, window_bounds = array<i64: 1, 1, 80, 96>}, {transform_indices = @transform_2, window_bounds = array<i64: 1, 1, 80, 96>}, {transform_indices = @transform_3, window_bounds = array<i64: 3, 3, 96, 64>}, {transform_indices = @transform_4, window_bounds = array<i64: 1, 64>}, {transform_indices = @transform_5, window_bounds = array<i64: 1, 1, 64, 64>}]} {
    %cst = arith.constant 0.000000e+00 : f32
    %0 = vector.broadcast %cst : f32 to vector<64x64xf32>
    %c64_i32 = arith.constant 64 : i32
    %1 = arith.muli %arg3, %c64_i32 : i32
    %c0_i32 = arith.constant 0 : i32
    %2 = arith.addi %1, %c0_i32 : i32
    %3 = tpu.assume_multiple %2, 8 : i32
    %c0 = arith.constant 0 : index
    %c0_0 = arith.constant 0 : index
    %4 = arith.index_cast %3 : i32 to index
    %c0_1 = arith.constant 0 : index
    %5 = vector.load %arg4[%c0, %c0_0, %4, %c0_1] : memref<1x1x80x96xbf16, #tpu.memory_space<vmem>>, vector<1x1x64x96xbf16>
    %6 = vector.shape_cast %5 : vector<1x1x64x96xbf16> to vector<64x96xbf16>
    %c0_2 = arith.constant 0 : index
    %c0_3 = arith.constant 0 : index
    %c0_4 = arith.constant 0 : index
    %c0_5 = arith.constant 0 : index
    %7 = vector.load %arg7[%c0_2, %c0_3, %c0_4, %c0_5] : memref<3x3x96x64xbf16, #tpu.memory_space<vmem>>, vector<1x1x96x64xbf16>
    %8 = vector.shape_cast %7 : vector<1x1x96x64xbf16> to vector<96x64xbf16>
    %cst_6 = arith.constant dense<0.000000e+00> : vector<64x64xf32>
    %9 = tpu.matmul %6, %8, %cst_6 {dimension_numbers = #tpu.dot_dimension_numbers<[1], [0], [0], [1], [0, 0, 1, 1], [], []>} : vector<64x96xbf16>, vector<96x64xbf16>, vector<64x64xf32> -> vector<64x64xf32>
    %10 = arith.addf %0, %9 : vector<64x64xf32>
    %c64_i32_7 = arith.constant 64 : i32
    %11 = arith.muli %arg3, %c64_i32_7 : i32
    %c8_i32 = arith.constant 8 : i32
    %12 = arith.addi %11, %c8_i32 : i32
    %13 = tpu.assume_multiple %12, 8 : i32
    %c0_8 = arith.constant 0 : index
    %c0_9 = arith.constant 0 : index
    %14 = arith.index_cast %13 : i32 to index
    %c0_10 = arith.constant 0 : index
    %15 = vector.load %arg4[%c0_8, %c0_9, %14, %c0_10] : memref<1x1x80x96xbf16, #tpu.memory_space<vmem>>, vector<1x1x64x96xbf16>
    %16 = vector.shape_cast %15 : vector<1x1x64x96xbf16> to vector<64x96xbf16>
    %c0_11 = arith.constant 0 : index
    %c1 = arith.constant 1 : index
    %c0_12 = arith.constant 0 : index
    %c0_13 = arith.constant 0 : index
    %17 = vector.load %arg7[%c0_11, %c1, %c0_12, %c0_13] : memref<3x3x96x64xbf16, #tpu.memory_space<vmem>>, vector<1x1x96x64xbf16>
    %18 = vector.shape_cast %17 : vector<1x1x96x64xbf16> to vector<96x64xbf16>
    %cst_14 = arith.constant dense<0.000000e+00> : vector<64x64xf32>
    %19 = tpu.matmul %16, %18, %cst_14 {dimension_numbers = #tpu.dot_dimension_numbers<[1], [0], [0], [1], [0, 0, 1, 1], [], []>} : vector<64x96xbf16>, vector<96x64xbf16>, vector<64x64xf32> -> vector<64x64xf32>
    %20 = arith.addf %10, %19 : vector<64x64xf32>
    %c64_i32_15 = arith.constant 64 : i32
    %21 = arith.muli %arg3, %c64_i32_15 : i32
    %c16_i32 = arith.constant 16 : i32
    %22 = arith.addi %21, %c16_i32 : i32
    %23 = tpu.assume_multiple %22, 8 : i32
    %c0_16 = arith.constant 0 : index
    %c0_17 = arith.constant 0 : index
    %24 = arith.index_cast %23 : i32 to index
    %c0_18 = arith.constant 0 : index
    %25 = vector.load %arg4[%c0_16, %c0_17, %24, %c0_18] : memref<1x1x80x96xbf16, #tpu.memory_space<vmem>>, vector<1x1x64x96xbf16>
    %26 = vector.shape_cast %25 : vector<1x1x64x96xbf16> to vector<64x96xbf16>
    %c0_19 = arith.constant 0 : index
    %c2 = arith.constant 2 : index
    %c0_20 = arith.constant 0 : index
    %c0_21 = arith.constant 0 : index
    %27 = vector.load %arg7[%c0_19, %c2, %c0_20, %c0_21] : memref<3x3x96x64xbf16, #tpu.memory_space<vmem>>, vector<1x1x96x64xbf16>
    %28 = vector.shape_cast %27 : vector<1x1x96x64xbf16> to vector<96x64xbf16>
    %cst_22 = arith.constant dense<0.000000e+00> : vector<64x64xf32>
    %29 = tpu.matmul %26, %28, %cst_22 {dimension_numbers = #tpu.dot_dimension_numbers<[1], [0], [0], [1], [0, 0, 1, 1], [], []>} : vector<64x96xbf16>, vector<96x64xbf16>, vector<64x64xf32> -> vector<64x64xf32>
    %30 = arith.addf %20, %29 : vector<64x64xf32>
    %c64_i32_23 = arith.constant 64 : i32
    %31 = arith.muli %arg3, %c64_i32_23 : i32
    %c0_i32_24 = arith.constant 0 : i32
    %32 = arith.addi %31, %c0_i32_24 : i32
    %33 = tpu.assume_multiple %32, 8 : i32
    %c0_25 = arith.constant 0 : index
    %c0_26 = arith.constant 0 : index
    %34 = arith.index_cast %33 : i32 to index
    %c0_27 = arith.constant 0 : index
    %35 = vector.load %arg5[%c0_25, %c0_26, %34, %c0_27] : memref<1x1x80x96xbf16, #tpu.memory_space<vmem>>, vector<1x1x64x96xbf16>
    %36 = vector.shape_cast %35 : vector<1x1x64x96xbf16> to vector<64x96xbf16>
    %c1_28 = arith.constant 1 : index
    %c0_29 = arith.constant 0 : index
    %c0_30 = arith.constant 0 : index
    %c0_31 = arith.constant 0 : index
    %37 = vector.load %arg7[%c1_28, %c0_29, %c0_30, %c0_31] : memref<3x3x96x64xbf16, #tpu.memory_space<vmem>>, vector<1x1x96x64xbf16>
    %38 = vector.shape_cast %37 : vector<1x1x96x64xbf16> to vector<96x64xbf16>
    %cst_32 = arith.constant dense<0.000000e+00> : vector<64x64xf32>
    %39 = tpu.matmul %36, %38, %cst_32 {dimension_numbers = #tpu.dot_dimension_numbers<[1], [0], [0], [1], [0, 0, 1, 1], [], []>} : vector<64x96xbf16>, vector<96x64xbf16>, vector<64x64xf32> -> vector<64x64xf32>
    %40 = arith.addf %30, %39 : vector<64x64xf32>
    %c64_i32_33 = arith.constant 64 : i32
    %41 = arith.muli %arg3, %c64_i32_33 : i32
    %c8_i32_34 = arith.constant 8 : i32
    %42 = arith.addi %41, %c8_i32_34 : i32
    %43 = tpu.assume_multiple %42, 8 : i32
    %c0_35 = arith.constant 0 : index
    %c0_36 = arith.constant 0 : index
    %44 = arith.index_cast %43 : i32 to index
    %c0_37 = arith.constant 0 : index
    %45 = vector.load %arg5[%c0_35, %c0_36, %44, %c0_37] : memref<1x1x80x96xbf16, #tpu.memory_space<vmem>>, vector<1x1x64x96xbf16>
    %46 = vector.shape_cast %45 : vector<1x1x64x96xbf16> to vector<64x96xbf16>
    %c1_38 = arith.constant 1 : index
    %c1_39 = arith.constant 1 : index
    %c0_40 = arith.constant 0 : index
    %c0_41 = arith.constant 0 : index
    %47 = vector.load %arg7[%c1_38, %c1_39, %c0_40, %c0_41] : memref<3x3x96x64xbf16, #tpu.memory_space<vmem>>, vector<1x1x96x64xbf16>
    %48 = vector.shape_cast %47 : vector<1x1x96x64xbf16> to vector<96x64xbf16>
    %cst_42 = arith.constant dense<0.000000e+00> : vector<64x64xf32>
    %49 = tpu.matmul %46, %48, %cst_42 {dimension_numbers = #tpu.dot_dimension_numbers<[1], [0], [0], [1], [0, 0, 1, 1], [], []>} : vector<64x96xbf16>, vector<96x64xbf16>, vector<64x64xf32> -> vector<64x64xf32>
    %50 = arith.addf %40, %49 : vector<64x64xf32>
    %c64_i32_43 = arith.constant 64 : i32
    %51 = arith.muli %arg3, %c64_i32_43 : i32
    %c16_i32_44 = arith.constant 16 : i32
    %52 = arith.addi %51, %c16_i32_44 : i32
    %53 = tpu.assume_multiple %52, 8 : i32
    %c0_45 = arith.constant 0 : index
    %c0_46 = arith.constant 0 : index
    %54 = arith.index_cast %53 : i32 to index
    %c0_47 = arith.constant 0 : index
    %55 = vector.load %arg5[%c0_45, %c0_46, %54, %c0_47] : memref<1x1x80x96xbf16, #tpu.memory_space<vmem>>, vector<1x1x64x96xbf16>
    %56 = vector.shape_cast %55 : vector<1x1x64x96xbf16> to vector<64x96xbf16>
    %c1_48 = arith.constant 1 : index
    %c2_49 = arith.constant 2 : index
    %c0_50 = arith.constant 0 : index
    %c0_51 = arith.constant 0 : index
    %57 = vector.load %arg7[%c1_48, %c2_49, %c0_50, %c0_51] : memref<3x3x96x64xbf16, #tpu.memory_space<vmem>>, vector<1x1x96x64xbf16>
    %58 = vector.shape_cast %57 : vector<1x1x96x64xbf16> to vector<96x64xbf16>
    %cst_52 = arith.constant dense<0.000000e+00> : vector<64x64xf32>
    %59 = tpu.matmul %56, %58, %cst_52 {dimension_numbers = #tpu.dot_dimension_numbers<[1], [0], [0], [1], [0, 0, 1, 1], [], []>} : vector<64x96xbf16>, vector<96x64xbf16>, vector<64x64xf32> -> vector<64x64xf32>
    %60 = arith.addf %50, %59 : vector<64x64xf32>
    %c64_i32_53 = arith.constant 64 : i32
    %61 = arith.muli %arg3, %c64_i32_53 : i32
    %c0_i32_54 = arith.constant 0 : i32
    %62 = arith.addi %61, %c0_i32_54 : i32
    %63 = tpu.assume_multiple %62, 8 : i32
    %c0_55 = arith.constant 0 : index
    %c0_56 = arith.constant 0 : index
    %64 = arith.index_cast %63 : i32 to index
    %c0_57 = arith.constant 0 : index
    %65 = vector.load %arg6[%c0_55, %c0_56, %64, %c0_57] : memref<1x1x80x96xbf16, #tpu.memory_space<vmem>>, vector<1x1x64x96xbf16>
    %66 = vector.shape_cast %65 : vector<1x1x64x96xbf16> to vector<64x96xbf16>
    %c2_58 = arith.constant 2 : index
    %c0_59 = arith.constant 0 : index
    %c0_60 = arith.constant 0 : index
    %c0_61 = arith.constant 0 : index
    %67 = vector.load %arg7[%c2_58, %c0_59, %c0_60, %c0_61] : memref<3x3x96x64xbf16, #tpu.memory_space<vmem>>, vector<1x1x96x64xbf16>
    %68 = vector.shape_cast %67 : vector<1x1x96x64xbf16> to vector<96x64xbf16>
    %cst_62 = arith.constant dense<0.000000e+00> : vector<64x64xf32>
    %69 = tpu.matmul %66, %68, %cst_62 {dimension_numbers = #tpu.dot_dimension_numbers<[1], [0], [0], [1], [0, 0, 1, 1], [], []>} : vector<64x96xbf16>, vector<96x64xbf16>, vector<64x64xf32> -> vector<64x64xf32>
    %70 = arith.addf %60, %69 : vector<64x64xf32>
    %c64_i32_63 = arith.constant 64 : i32
    %71 = arith.muli %arg3, %c64_i32_63 : i32
    %c8_i32_64 = arith.constant 8 : i32
    %72 = arith.addi %71, %c8_i32_64 : i32
    %73 = tpu.assume_multiple %72, 8 : i32
    %c0_65 = arith.constant 0 : index
    %c0_66 = arith.constant 0 : index
    %74 = arith.index_cast %73 : i32 to index
    %c0_67 = arith.constant 0 : index
    %75 = vector.load %arg6[%c0_65, %c0_66, %74, %c0_67] : memref<1x1x80x96xbf16, #tpu.memory_space<vmem>>, vector<1x1x64x96xbf16>
    %76 = vector.shape_cast %75 : vector<1x1x64x96xbf16> to vector<64x96xbf16>
    %c2_68 = arith.constant 2 : index
    %c1_69 = arith.constant 1 : index
    %c0_70 = arith.constant 0 : index
    %c0_71 = arith.constant 0 : index
    %77 = vector.load %arg7[%c2_68, %c1_69, %c0_70, %c0_71] : memref<3x3x96x64xbf16, #tpu.memory_space<vmem>>, vector<1x1x96x64xbf16>
    %78 = vector.shape_cast %77 : vector<1x1x96x64xbf16> to vector<96x64xbf16>
    %cst_72 = arith.constant dense<0.000000e+00> : vector<64x64xf32>
    %79 = tpu.matmul %76, %78, %cst_72 {dimension_numbers = #tpu.dot_dimension_numbers<[1], [0], [0], [1], [0, 0, 1, 1], [], []>} : vector<64x96xbf16>, vector<96x64xbf16>, vector<64x64xf32> -> vector<64x64xf32>
    %80 = arith.addf %70, %79 : vector<64x64xf32>
    %c64_i32_73 = arith.constant 64 : i32
    %81 = arith.muli %arg3, %c64_i32_73 : i32
    %c16_i32_74 = arith.constant 16 : i32
    %82 = arith.addi %81, %c16_i32_74 : i32
    %83 = tpu.assume_multiple %82, 8 : i32
    %c0_75 = arith.constant 0 : index
    %c0_76 = arith.constant 0 : index
    %84 = arith.index_cast %83 : i32 to index
    %c0_77 = arith.constant 0 : index
    %85 = vector.load %arg6[%c0_75, %c0_76, %84, %c0_77] : memref<1x1x80x96xbf16, #tpu.memory_space<vmem>>, vector<1x1x64x96xbf16>
    %86 = vector.shape_cast %85 : vector<1x1x64x96xbf16> to vector<64x96xbf16>
    %c2_78 = arith.constant 2 : index
    %c2_79 = arith.constant 2 : index
    %c0_80 = arith.constant 0 : index
    %c0_81 = arith.constant 0 : index
    %87 = vector.load %arg7[%c2_78, %c2_79, %c0_80, %c0_81] : memref<3x3x96x64xbf16, #tpu.memory_space<vmem>>, vector<1x1x96x64xbf16>
    %88 = vector.shape_cast %87 : vector<1x1x96x64xbf16> to vector<96x64xbf16>
    %cst_82 = arith.constant dense<0.000000e+00> : vector<64x64xf32>
    %89 = tpu.matmul %86, %88, %cst_82 {dimension_numbers = #tpu.dot_dimension_numbers<[1], [0], [0], [1], [0, 0, 1, 1], [], []>} : vector<64x96xbf16>, vector<96x64xbf16>, vector<64x64xf32> -> vector<64x64xf32>
    %90 = arith.addf %80, %89 : vector<64x64xf32>
    %c0_83 = arith.constant 0 : index
    %c0_84 = arith.constant 0 : index
    %91 = vector.load %arg8[%c0_83, %c0_84] : memref<1x64xf32, #tpu.memory_space<vmem>>, vector<1x64xf32>
    %92 = vector.broadcast %91 : vector<1x64xf32> to vector<64x64xf32>
    %93 = arith.addf %90, %92 : vector<64x64xf32>
    %cst_85 = arith.constant 0.000000e+00 : f32
    %94 = vector.broadcast %cst_85 : f32 to vector<64x64xf32>
    %95 = arith.maximumf %93, %94 : vector<64x64xf32>
    %96 = arith.truncf %95 : vector<64x64xf32> to vector<64x64xbf16>
    %c0_86 = arith.constant 0 : index
    %c0_87 = arith.constant 0 : index
    %c0_88 = arith.constant 0 : index
    %c0_89 = arith.constant 0 : index
    %97 = vector.load %arg9[%c0_86, %c0_87, %c0_88, %c0_89] : memref<1x1x64x64xbf16, #tpu.memory_space<vmem>>, vector<1x1x64x64xbf16>
    %98 = vector.shape_cast %97 : vector<1x1x64x64xbf16> to vector<64x64xbf16>
    %99 = vector.shape_cast %96 : vector<64x64xbf16> to vector<1x1x64x64xbf16>
    tpu.vector_store %arg9[%c0_86, %c0_87, %c0_88, %c0_89], %99 {strides = array<i32>} : memref<1x1x64x64xbf16, #tpu.memory_space<vmem>>, vector<1x1x64x64xbf16>,
    return
  }
  func.func @transform_0(%arg0: i32, %arg1: i32, %arg2: i32, %arg3: i32) -> (i32, i32, i32, i32) {
    %c0_i32 = arith.constant 0 : i32
    %0 = arith.addi %arg2, %c0_i32 : i32
    %c0_i32_0 = arith.constant 0 : i32
    %c0_i32_1 = arith.constant 0 : i32
    %c0_i32_2 = arith.constant 0 : i32
    return %arg0, %0, %c0_i32_0, %c0_i32_1 : i32, i32, i32, i32
  }
  func.func @transform_1(%arg0: i32, %arg1: i32, %arg2: i32, %arg3: i32) -> (i32, i32, i32, i32) {
    %c1_i32 = arith.constant 1 : i32
    %0 = arith.addi %arg2, %c1_i32 : i32
    %c0_i32 = arith.constant 0 : i32
    %c0_i32_0 = arith.constant 0 : i32
    %c0_i32_1 = arith.constant 0 : i32
    return %arg0, %0, %c0_i32, %c0_i32_0 : i32, i32, i32, i32
  }
  func.func @transform_2(%arg0: i32, %arg1: i32, %arg2: i32, %arg3: i32) -> (i32, i32, i32, i32) {
    %c2_i32 = arith.constant 2 : i32
    %0 = arith.addi %arg2, %c2_i32 : i32
    %c0_i32 = arith.constant 0 : i32
    %c0_i32_0 = arith.constant 0 : i32
    %c0_i32_1 = arith.constant 0 : i32
    return %arg0, %0, %c0_i32, %c0_i32_0 : i32, i32, i32, i32
  }
  func.func @transform_3(%arg0: i32, %arg1: i32, %arg2: i32, %arg3: i32) -> (i32, i32, i32, i32) {
    %c0_i32 = arith.constant 0 : i32
    %c0_i32_0 = arith.constant 0 : i32
    %c0_i32_1 = arith.constant 0 : i32
    %c0_i32_2 = arith.constant 0 : i32
    return %c0_i32, %c0_i32_0, %c0_i32_1, %arg1 : i32, i32, i32, i32
  }
  func.func @transform_4(%arg0: i32, %arg1: i32, %arg2: i32, %arg3: i32) -> (i32, i32) {
    %c0_i32 = arith.constant 0 : i32
    %c0_i32_0 = arith.constant 0 : i32
    return %c0_i32, %arg1 : i32, i32
  }
  func.func @transform_5(%arg0: i32, %arg1: i32, %arg2: i32, %arg3: i32) -> (i32, i32, i32, i32) {
    %c0_i32 = arith.constant 0 : i32
    return %arg0, %arg2, %arg3, %arg1 : i32, i32, i32, i32
  }
}

</mosaic_0001>

<llo_original>
// kernel: tpu_custom_call.1
$region0: #{tpu_custom_call.1}
  #allocation0 [shape = 'u32[]', space=smem, size = 0x4, offset = 0x4, fixed_abs, tag = 'smem constant byte address 0x4 - core index']
  #allocation1 [shape = 'u32[144,128]{1,0:T(1,128)}', space=vmem, size = 0x12000, scoped, tag = 'internal scratch']
  %s0 = inlined_call_operand.hbm [shape: bf16[1,4,80,96], index: 0, kind: input, shape index: {}]
  %s1 = inlined_call_operand.hbm [shape: bf16[1,4,80,96], index: 1, kind: input, shape index: {}]
  %s2 = inlined_call_operand.hbm [shape: bf16[1,4,80,96], index: 2, kind: input, shape index: {}]
  %s3 = inlined_call_operand.hbm [shape: bf16[3,3,96,64], index: 3, kind: input, shape index: {}]
  %s4 = inlined_call_operand.hbm [shape: f32[1,64], index: 4, kind: input, shape index: {}]
  %s5 = inlined_call_operand.hbm [shape: bf16[1,2,64,64], index: 5, kind: output, shape index: {}]
  %s6 = sld [smem:[#allocation0]]
  $region73: #{tpu_custom_call.1} parent=0
    _
  %s8 = ssub.s32 1, %s6
  %s9 = scalar_select 0, %s8, %s6
  $region1: #{tpu_custom_call.1} parent=0
    #allocation2 [shape = 'u8[40960]{0}', space=vmem, size = 0xa000, scoped, tag = 'input window, operand 0']
    #allocation3 [shape = 's32[2]{0}', space=sflag, size = 0x8, scoped, tag = 'scoped memory for tpu_custom_call.1']
    #allocation4 [shape = 's32[2]{0}', space=sflag, size = 0x8, scoped, tag = 'scoped memory for tpu_custom_call.1']
    #allocation5 [shape = 'u8[40960]{0}', space=vmem, size = 0xa000, scoped, tag = 'input window, operand 1']
    #allocation6 [shape = 's32[2]{0}', space=sflag, size = 0x8, scoped, tag = 'scoped memory for tpu_custom_call.1']
    #allocation7 [shape = 'u8[40960]{0}', space=vmem, size = 0xa000, scoped, tag = 'input window, operand 2']
    #allocation8 [shape = 'u8[221184]{0}', space=vmem, size = 0x36000, scoped, tag = 'input window, operand 3, single buffered']
    #allocation9 [shape = 's32[1]{0}', space=sflag, size = 0x4, scoped, tag = 'scoped memory for tpu_custom_call.1']
    #allocation10 [shape = 'u8[512]{0}', space=vmem, size = 0x400, scoped, tag = 'input window, operand 4, single buffered']
    #allocation11 [shape = 'u8[32768]{0}', space=vmem, size = 0x8000, scoped, tag = 'output window, operand 0']
    %10 = vsyncpa [#allocation3], 0
    %s11 = scalar_lea.sflag [#allocation3], 1
    %12 = vsyncpa %s11, 0
    %13 = vsyncpa [#allocation6], 0
    %s14 = scalar_lea.sflag [#allocation6], 1
    %15 = vsyncpa %s14, 0
    %16 = vsyncpa [#allocation9], 0
    %17 = vsyncpa [#allocation4], 0
    %s18 = scalar_lea.sflag [#allocation4], 1
    %19 = vsyncpa %s18, 0
    loop: start=0, step=1, limit=4
    $region2: #{tpu_custom_call.1} parent=1 // loop_pre_header
      _
    $region3: #{tpu_custom_call.1} parent=1 // loop_header
      %s21 = sphi 0, %s25
      %p22 = scmp.ge.s32.totalorder %s21, 4
      %s28 = sphi 0, %s54
      %s29 = sphi 0, %s50
      %s30 = sphi 0, %s46
      %s31 = sphi 0, %s42
      %s32 = sphi 0, %s28
      %s33 = sphi 0, %s29
      %s34 = sphi 0, %s30
      %s35 = sphi 0, %s31
      %s36 = sphi 0, %s32
      %s37 = sphi 0, %s33
      %s38 = sphi 0, %s34
      %s39 = sphi 0, %s35
      %s59 = sphi 0, %s61
      %s62 = sphi 0, %s59
      %s63 = sphi 0, %s62
      %s79 = sphi 0, %s63
      %s89 = sphi 0, %s91
      %s92 = sphi 0, %s89
      %s93 = sphi 0, %s92
      %s109 = sphi 0, %s93
      %s119 = sphi 0, %s121
      %s122 = sphi 0, %s119
      %s123 = sphi 0, %s122
      %s139 = sphi 0, %s123
      %s145 = sphi 0, %s147
      %s148 = sphi 0, %s145
      %s149 = sphi 0, %s148
      %s165 = sphi 0, %s149
      %s171 = sphi 0, %s173
      %s174 = sphi 0, %s171
      %s175 = sphi 0, %s174
      %s191 = sphi 0, %s175
      %s203 = sphi 0, %s205
      %s206 = sphi 0, %s203
      %s207 = sphi 0, %s206
      %s223 = sphi 0, %s207
    $region4: #{tpu_custom_call.1} parent=1 // loop_header_branch
      %24 = sbr.rel (%p22) target = $region8
    $region5: #{tpu_custom_call.1} parent=1 // loop_body
      %s26 = ssub.s32 %s21, 1
      %s27 = ssub.s32 %s21, 2
      %s40 = sadd.s32 1, %s31
      %p41 = scmp.ge.s32.totalorder %s40, 1
      %s42 = scalar_select %p41, 0, %s40
      %s43 = sadd.s32 1, %s30
      %s44 = scalar_select %p41, %s43, %s30
      %p45 = scmp.ge.s32.totalorder %s44, 2
      %s46 = scalar_select %p45, 0, %s44
      %s47 = sadd.s32 1, %s29
      %s48 = scalar_select %p45, %s47, %s29
      %p49 = scmp.ge.s32.totalorder %s48, 1
      %s50 = scalar_select %p49, 0, %s48
      %s51 = sadd.s32 1, %s28
      %s52 = scalar_select %p49, %s51, %s28
      %p53 = scmp.ge.s32.totalorder %s52, 1
      %s54 = scalar_select %p53, 0, %s52
      %s55 = ssub.s32 %s28, %s54
      %s56 = ssub.s32 %s30, %s46
      %s57 = sor.u32 %s55, %s56
      %p58 = scmp.eq.s32.totalorder %s57, 0
      %s60 = sadd.s32 %s59, 1
      %s61 = scalar_select %p58, %s59, %s60
      %p64 = pneg %p58
      %p65 = scmp.eq.s32.totalorder %s21, 1
      %p66 = por %p64, %p65
      %p67 = scmp.ne.s32.totalorder %s59, %s62
      %p68 = scmp.eq.s32.totalorder %s21, 0
      %p69 = por %p67, %p68
      %p70 = scmp.ne.s32.totalorder %s59, %s62
      %p71 = scmp.eq.s32.totalorder %s26, 1
      %p72 = por %p70, %p71
      %p73 = scmp.ne.s32.totalorder %s62, %s63
      %p74 = scmp.eq.s32.totalorder %s26, 0
      %p75 = por %p73, %p74
      %p76 = scmp.ne.s32.totalorder %s62, %s63
      %p77 = scmp.eq.s32.totalorder %s27, 1
      %p78 = por %p76, %p77
      %p80 = scmp.ne.s32.totalorder %s63, %s79
      %p81 = scmp.eq.s32.totalorder %s27, 0
      %p82 = por %p80, %p81
      %s83 = sadd.s32 %s30, 1
      %s84 = sadd.s32 %s46, 1
      %s85 = ssub.s32 %s28, %s54
      %s86 = ssub.s32 %s83, %s84
      %s87 = sor.u32 %s85, %s86
      %p88 = scmp.eq.s32.totalorder %s87, 0
      %s90 = sadd.s32 %s89, 1
      %s91 = scalar_select %p88, %s89, %s90
      %p94 = pneg %p88
      %p95 = scmp.eq.s32.totalorder %s21, 1
      %p96 = por %p94, %p95
      %p97 = scmp.ne.s32.totalorder %s89, %s92
      %p98 = scmp.eq.s32.totalorder %s21, 0
      %p99 = por %p97, %p98
      %p100 = scmp.ne.s32.totalorder %s89, %s92
      %p101 = scmp.eq.s32.totalorder %s26, 1
      %p102 = por %p100, %p101
      %p103 = scmp.ne.s32.totalorder %s92, %s93
      %p104 = scmp.eq.s32.totalorder %s26, 0
      %p105 = por %p103, %p104
      %p106 = scmp.ne.s32.totalorder %s92, %s93
      %p107 = scmp.eq.s32.totalorder %s27, 1
      %p108 = por %p106, %p107
      %p110 = scmp.ne.s32.totalorder %s93, %s109
      %p111 = scmp.eq.s32.totalorder %s27, 0
      %p112 = por %p110, %p111
      %s113 = sadd.s32 %s30, 2
      %s114 = sadd.s32 %s46, 2
      %s115 = ssub.s32 %s28, %s54
      %s116 = ssub.s32 %s113, %s114
      %s117 = sor.u32 %s115, %s116
      %p118 = scmp.eq.s32.totalorder %s117, 0
      %s120 = sadd.s32 %s119, 1
      %s121 = scalar_select %p118, %s119, %s120
      %p124 = pneg %p118
      %p125 = scmp.eq.s32.totalorder %s21, 1
      %p126 = por %p124, %p125
      %p127 = scmp.ne.s32.totalorder %s119, %s122
      %p128 = scmp.eq.s32.totalorder %s21, 0
      %p129 = por %p127, %p128
      %p130 = scmp.ne.s32.totalorder %s119, %s122
      %p131 = scmp.eq.s32.totalorder %s26, 1
      %p132 = por %p130, %p131
      %p133 = scmp.ne.s32.totalorder %s122, %s123
      %p134 = scmp.eq.s32.totalorder %s26, 0
      %p135 = por %p133, %p134
      %p136 = scmp.ne.s32.totalorder %s122, %s123
      %p137 = scmp.eq.s32.totalorder %s27, 1
      %p138 = por %p136, %p137
      %p140 = scmp.ne.s32.totalorder %s123, %s139
      %p141 = scmp.eq.s32.totalorder %s27, 0
      %p142 = por %p140, %p141
      %s143 = ssub.s32 %s29, %s50
      %p144 = scmp.eq.s32.totalorder %s143, 0
      %s146 = sadd.s32 %s145, 1
      %s147 = scalar_select %p144, %s145, %s146
      %p150 = pneg %p144
      %p151 = scmp.eq.s32.totalorder %s21, 1
      %p152 = por %p150, %p151
      %p153 = scmp.ne.s32.totalorder %s145, %s148
      %p154 = scmp.eq.s32.totalorder %s21, 0
      %p155 = por %p153, %p154
      %p156 = scmp.ne.s32.totalorder %s145, %s148
      %p157 = scmp.eq.s32.totalorder %s26, 1
      %p158 = por %p156, %p157
      %p159 = scmp.ne.s32.totalorder %s148, %s149
      %p160 = scmp.eq.s32.totalorder %s26, 0
      %p161 = por %p159, %p160
      %p162 = scmp.ne.s32.totalorder %s148, %s149
      %p163 = scmp.eq.s32.totalorder %s27, 1
      %p164 = por %p162, %p163
      %p166 = scmp.ne.s32.totalorder %s149, %s165
      %p167 = scmp.eq.s32.totalorder %s27, 0
      %p168 = por %p166, %p167
      %s169 = ssub.s32 %s29, %s50
      %p170 = scmp.eq.s32.totalorder %s169, 0
      %s172 = sadd.s32 %s171, 1
      %s173 = scalar_select %p170, %s171, %s172
      %p176 = pneg %p170
      %p177 = scmp.eq.s32.totalorder %s21, 1
      %p178 = por %p176, %p177
      %p179 = scmp.ne.s32.totalorder %s171, %s174
      %p180 = scmp.eq.s32.totalorder %s21, 0
      %p181 = por %p179, %p180
      %p182 = scmp.ne.s32.totalorder %s171, %s174
      %p183 = scmp.eq.s32.totalorder %s26, 1
      %p184 = por %p182, %p183
      %p185 = scmp.ne.s32.totalorder %s174, %s175
      %p186 = scmp.eq.s32.totalorder %s26, 0
      %p187 = por %p185, %p186
      %p188 = scmp.ne.s32.totalorder %s174, %s175
      %p189 = scmp.eq.s32.totalorder %s27, 1
      %p190 = por %p188, %p189
      %p192 = scmp.ne.s32.totalorder %s175, %s191
      %p193 = scmp.eq.s32.totalorder %s27, 0
      %p194 = por %p192, %p193
      %s195 = ssub.s32 %s28, %s54
      %s196 = ssub.s32 %s30, %s46
      %s197 = sor.u32 %s195, %s196
      %s198 = ssub.s32 %s31, %s42
      %s199 = sor.u32 %s197, %s198
      %s200 = ssub.s32 %s29, %s50
      %s201 = sor.u32 %s199, %s200
      %p202 = scmp.eq.s32.totalorder %s201, 0
      %s204 = sadd.s32 %s203, 1
      %s205 = scalar_select %p202, %s203, %s204
      %p208 = pneg %p202
      %p209 = scmp.eq.s32.totalorder %s21, 1
      %p210 = por %p208, %p209
      %p211 = scmp.ne.s32.totalorder %s203, %s206
      %p212 = scmp.eq.s32.totalorder %s21, 0
      %p213 = por %p211, %p212
      %p214 = scmp.ne.s32.totalorder %s203, %s206
      %p215 = scmp.eq.s32.totalorder %s26, 1
      %p216 = por %p214, %p215
      %p217 = scmp.ne.s32.totalorder %s206, %s207
      %p218 = scmp.eq.s32.totalorder %s26, 0
      %p219 = por %p217, %p218
      %p220 = scmp.ne.s32.totalorder %s206, %s207
      %p221 = scmp.eq.s32.totalorder %s27, 1
      %p222 = por %p220, %p221
      %p224 = scmp.ne.s32.totalorder %s207, %s223
      %p225 = scmp.eq.s32.totalorder %s27, 0
      %p226 = por %p224, %p225
      %p227 = scmp.le.s32.totalorder 1, %s21
      %p228 = scmp.lt.s32.totalorder %s21, 3
      %p229 = pnand %p227, %p228
      %p230 = pneg %p229
      // Predicated region
      $region9: #{tpu_custom_call.1} parent=5 // pred_check
        _
      $region10: #{tpu_custom_call.1} parent=5 // pred_check_branch
        %232 = sbr.rel (%p229) target = $region12
      $region11: #{tpu_custom_call.1} parent=5 // pred_region
        %s233 = ssub.s32 %s21, 1
        // Predicated region
        $region13: #{tpu_custom_call.1} parent=11 // pred_check
          %p234 = pneg %p161
        $region14: #{tpu_custom_call.1} parent=11 // pred_check_branch
          %236 = sbr.rel (%p234) target = $region16
        $region15: #{tpu_custom_call.1} parent=11 // pred_region
          %s238 = ssub.s32 6912, 6912
          %239 = vsyncadd [#allocation9], %s238
          %s240 = smul.addr %s33, 64
          %s241 = scalar_lea.hbm %s3, %s240
          %s242 = sshll.u32 [#allocation8], 4
          %s243 = int_to_ptr.vmem [resolvable:$true] %s242
          %248 = dma.hbm_to_vmem [thread:$0]  %s241, 6912, %s243, [#allocation9], 64, 64, 4
        $region16: #{tpu_custom_call.1} parent=11 // pred_fallthru
          _
        // Predicated region
        $region17: #{tpu_custom_call.1} parent=11 // pred_check
          %p249 = pneg %p187
        $region18: #{tpu_custom_call.1} parent=11 // pred_check_branch
          %251 = sbr.rel (%p249) target = $region20
        $region19: #{tpu_custom_call.1} parent=11 // pred_region
          %s253 = ssub.s32 16, 16
          %254 = vsyncadd [#allocation9], %s253
          %s255 = smul.addr %s33, 16
          %s256 = scalar_lea.hbm %s4, %s255
          %s258 = sshll.u32 [#allocation10], 4
          %s259 = int_to_ptr.vmem [resolvable:$true] %s258
          %261 = dma.hbm_to_vmem [thread:$0]  %s256, 16, %s259, [#allocation9]
        $region20: #{tpu_custom_call.1} parent=11 // pred_fallthru
          _
      $region12: #{tpu_custom_call.1} parent=5 // pred_fallthru
        _
      %p262 = scmp.lt.s32.totalorder %s21, 2
      // Predicated region
      $region21: #{tpu_custom_call.1} parent=5 // pred_check
        %p263 = pneg %p262
      $region22: #{tpu_custom_call.1} parent=5 // pred_check_branch
        %265 = sbr.rel (%p263) target = $region24
      $region23: #{tpu_custom_call.1} parent=5 // pred_region
        // Predicated region
        $region25: #{tpu_custom_call.1} parent=23 // pred_check
          %p266 = pneg %p69
        $region26: #{tpu_custom_call.1} parent=23 // pred_check_branch
          %268 = sbr.rel (%p266) target = $region28
        $region27: #{tpu_custom_call.1} parent=23 // pred_region
          %s269 = sand.u32 %s59, 1
          %s270 = scalar_lea.sflag [#allocation3], %s269
          %s271 = sand.u32 %s59, 1
          %s272 = smul.addr %s271, 40
          %s273 = scalar_lea.vmem [#allocation2], %s272
          %s275 = ssub.s32 640, 640
          %276 = vsyncadd %s270, %s275
          %s277 = smul.addr %s30, 10
          %s278 = smul.addr %s28, 40
          %s279 = sadd.s32 %s277, %s278
          %s280 = smul.addr %s279, 64
          %s281 = scalar_lea.hbm %s0, %s280
          %s282 = sshll.u32 %s273, 4
          %s283 = int_to_ptr.vmem [resolvable:$true] %s282
          %288 = dma.hbm_to_vmem [thread:$0]  %s281, 640, %s283, %s270, 64, 64, 4
        $region28: #{tpu_custom_call.1} parent=23 // pred_fallthru
          _
        // Predicated region
        $region29: #{tpu_custom_call.1} parent=23 // pred_check
          %p289 = pneg %p99
        $region30: #{tpu_custom_call.1} parent=23 // pred_check_branch
          %291 = sbr.rel (%p289) target = $region32
        $region31: #{tpu_custom_call.1} parent=23 // pred_region
          %s292 = sand.u32 %s21, 1
          %s293 = scalar_lea.sflag [#allocation6], %s292
          %s294 = sand.u32 %s89, 1
          %s295 = smul.addr %s294, 40
          %s296 = scalar_lea.vmem [#allocation5], %s295
          %s297 = sadd.s32 %s30, 1
          %s299 = ssub.s32 640, 640
          %300 = vsyncadd %s293, %s299
          %s301 = smul.addr %s297, 10
          %s302 = smul.addr %s28, 40
          %s303 = sadd.s32 %s301, %s302
          %s304 = smul.addr %s303, 64
          %s305 = scalar_lea.hbm %s1, %s304
          %s306 = sshll.u32 %s296, 4
          %s307 = int_to_ptr.vmem [resolvable:$true] %s306
          %312 = dma.hbm_to_vmem [thread:$0]  %s305, 640, %s307, %s293, 64, 64, 4
        $region32: #{tpu_custom_call.1} parent=23 // pred_fallthru
          _
        // Predicated region
        $region33: #{tpu_custom_call.1} parent=23 // pred_check
          %p313 = pneg %p129
        $region34: #{tpu_custom_call.1} parent=23 // pred_check_branch
          %315 = sbr.rel (%p313) target = $region36
        $region35: #{tpu_custom_call.1} parent=23 // pred_region
          %s316 = sand.u32 %s21, 1
          %s317 = scalar_lea.sflag [#allocation6], %s316
          %s318 = sand.u32 %s119, 1
          %s319 = smul.addr %s318, 40
          %s320 = scalar_lea.vmem [#allocation7], %s319
          %s321 = sadd.s32 %s30, 2
          %s323 = ssub.s32 640, 640
          %324 = vsyncadd %s317, %s323
          %s325 = smul.addr %s321, 10
          %s326 = smul.addr %s28, 40
          %s327 = sadd.s32 %s325, %s326
          %s328 = smul.addr %s327, 64
          %s329 = scalar_lea.hbm %s2, %s328
          %s330 = sshll.u32 %s320, 4
          %s331 = int_to_ptr.vmem [resolvable:$true] %s330
          %336 = dma.hbm_to_vmem [thread:$0]  %s329, 640, %s331, %s317, 64, 64, 4
        $region36: #{tpu_custom_call.1} parent=23 // pred_fallthru
          _
      $region24: #{tpu_custom_call.1} parent=5 // pred_fallthru
        _
      %p337 = scmp.le.s32.totalorder 1, %s21
      %p338 = scmp.lt.s32.totalorder %s21, 3
      %p339 = pnand %p337, %p338
      %p340 = pneg %p339
      // Predicated region
      $region37: #{tpu_custom_call.1} parent=5 // pred_check
        _
      $region38: #{tpu_custom_call.1} parent=5 // pred_check_branch
        %342 = sbr.rel (%p339) target = $region40
      $region39: #{tpu_custom_call.1} parent=5 // pred_region
        %s343 = ssub.s32 %s21, 1
        %s344 = sand.u32 %s62, 1
        %s345 = scalar_lea.sflag [#allocation3], %s344
        %s346 = sand.u32 %s62, 1
        %s347 = smul.addr %s346, 40
        %s348 = scalar_lea.vmem [#allocation2], %s347
        // Predicated region
        $region41: #{tpu_custom_call.1} parent=39 // pred_check
          %p349 = pneg %p75
        $region42: #{tpu_custom_call.1} parent=39 // pred_check_branch
          %351 = sbr.rel (%p349) target = $region44
        $region43: #{tpu_custom_call.1} parent=39 // pred_region
          %352 = dma.done %s345, 640
        $region44: #{tpu_custom_call.1} parent=39 // pred_fallthru
          _
        %s353 = sand.u32 %s26, 1
        %s354 = scalar_lea.sflag [#allocation6], %s353
        %s355 = sand.u32 %s92, 1
        %s356 = smul.addr %s355, 40
        %s357 = scalar_lea.vmem [#allocation5], %s356
        // Predicated region
        $region45: #{tpu_custom_call.1} parent=39 // pred_check
          %p358 = pneg %p105
        $region46: #{tpu_custom_call.1} parent=39 // pred_check_branch
          %360 = sbr.rel (%p358) target = $region48
        $region47: #{tpu_custom_call.1} parent=39 // pred_region
          %361 = dma.done %s354, 640
        $region48: #{tpu_custom_call.1} parent=39 // pred_fallthru
          _
        %s362 = sand.u32 %s26, 1
        %s363 = scalar_lea.sflag [#allocation6], %s362
        %s364 = sand.u32 %s122, 1
        %s365 = smul.addr %s364, 40
        %s366 = scalar_lea.vmem [#allocation7], %s365
        // Predicated region
        $region49: #{tpu_custom_call.1} parent=39 // pred_check
          %p367 = pneg %p135
        $region50: #{tpu_custom_call.1} parent=39 // pred_check_branch
          %369 = sbr.rel (%p367) target = $region52
        $region51: #{tpu_custom_call.1} parent=39 // pred_region
          %370 = dma.done %s363, 640
        $region52: #{tpu_custom_call.1} parent=39 // pred_fallthru
          _
        // Predicated region
        $region53: #{tpu_custom_call.1} parent=39 // pred_check
          %p371 = pneg %p161
        $region54: #{tpu_custom_call.1} parent=39 // pred_check_branch
          %373 = sbr.rel (%p371) target = $region56
        $region55: #{tpu_custom_call.1} parent=39 // pred_region
          %374 = dma.done [#allocation9], 6912
        $region56: #{tpu_custom_call.1} parent=39 // pred_fallthru
          _
        // Predicated region
        $region57: #{tpu_custom_call.1} parent=39 // pred_check
          %p375 = pneg %p187
        $region58: #{tpu_custom_call.1} parent=39 // pred_check_branch
          %377 = sbr.rel (%p375) target = $region60
        $region59: #{tpu_custom_call.1} parent=39 // pred_region
          %378 = dma.done [#allocation9], 16
        $region60: #{tpu_custom_call.1} parent=39 // pred_fallthru
          _
        %s379 = sand.u32 %s62, 1
        %s380 = scalar_lea.sflag [#allocation3], %s379
        %s381 = sand.u32 %s62, 1
        %s382 = smul.addr %s381, 40
        %s383 = scalar_lea.vmem [#allocation2], %s382
        %p384 = pneg %p75
        %p385 = pneg %p72
        %s386 = sand.u32 %s26, 1
        %s387 = scalar_lea.sflag [#allocation6], %s386
        %s388 = sand.u32 %s92, 1
        %s389 = smul.addr %s388, 40
        %s390 = scalar_lea.vmem [#allocation5], %s389
        %p391 = pneg %p105
        %p392 = pneg %p102
        %s393 = sand.u32 %s26, 1
        %s394 = scalar_lea.sflag [#allocation6], %s393
        %s395 = sand.u32 %s122, 1
        %s396 = smul.addr %s395, 40
        %s397 = scalar_lea.vmem [#allocation7], %s396
        %p398 = pneg %p135
        %p399 = pneg %p132
        %p400 = pneg %p161
        %p401 = pneg %p158
        %p402 = pneg %p187
        %p403 = pneg %p184
        %p404 = pneg %p219
        %p405 = pneg %p216
        %s406 = sand.u32 %s206, 1
        %s407 = scalar_lea.sflag [#allocation4], %s406
        %s408 = sand.u32 %s206, 1
        %s409 = smul.addr %s408, 32
        %s410 = scalar_lea.vmem [#allocation11], %s409
        %s411 = sadd.s32 %s34, 1
        %s412 = sadd.s32 %s34, 2
        %s413 = smul.u32 8, %s35
        %s415 = smul.u32 %s35, 64
        %s416 = sshra.s32 %s415, 3
        %s417 = sand.u32 %s415, 7
        %s418 = smul.addr %s416, 4
        %s419 = scalar_lea.vmem %s348, %s418 [#allocation2]
        %v420 = vld [vmem:[%s419] sm:$0xf]
        %v421 = vld [vmem:[%s419 + $0x4] sm:$0xf]
        %v422 = vld [vmem:[%s419 + $0x8] sm:$0xf]
        %v423 = vld [vmem:[%s419 + $0xc] sm:$0xf]
        %v424 = vld [vmem:[%s419 + $0x10] sm:$0xf]
        %v425 = vld [vmem:[%s419 + $0x14] sm:$0xf]
        %v426 = vld [vmem:[%s419 + $0x18] sm:$0xf]
        %v427 = vld [vmem:[%s419 + $0x1c] sm:$0xf]
        %v428 = vld [vmem:[#allocation8] sm:$0xf]
        %v429 = vld [vmem:[#allocation8 + $0x4] sm:$0xf]
        %v430 = vld [vmem:[#allocation8 + $0x8] sm:$0xf]
        %v431 = vld [vmem:[#allocation8 + $0xc] sm:$0xf]
        %v432 = vld [vmem:[#allocation8 + $0x10] sm:$0xf]
        %v433 = vld [vmem:[#allocation8 + $0x14] sm:$0xf]
        %v434 = vld [vmem:[#allocation8 + $0x18] sm:$0xf]
        %v435 = vld [vmem:[#allocation8 + $0x1c] sm:$0xf]
        %v436 = vld [vmem:[#allocation8 + $0x20] sm:$0xf]
        %v437 = vld [vmem:[#allocation8 + $0x24] sm:$0xf]
        %v438 = vld [vmem:[#allocation8 + $0x28] sm:$0xf]
        %v439 = vld [vmem:[#allocation8 + $0x2c] sm:$0xf]
        %s440 = sadd.s32 %s415, 8
        %s441 = sshra.s32 %s440, 3
        %s442 = sand.u32 %s440, 7
        %s443 = smul.addr %s441, 4
        %s444 = scalar_lea.vmem %s348, %s443 [#allocation2]
        %v445 = vld [vmem:[%s444] sm:$0xf]
        %v446 = vld [vmem:[%s444 + $0x4] sm:$0xf]
        %v447 = vld [vmem:[%s444 + $0x8] sm:$0xf]
        %v448 = vld [vmem:[%s444 + $0xc] sm:$0xf]
        %v449 = vld [vmem:[%s444 + $0x10] sm:$0xf]
        %v450 = vld [vmem:[%s444 + $0x14] sm:$0xf]
        %v451 = vld [vmem:[%s444 + $0x18] sm:$0xf]
        %v452 = vld [vmem:[%s444 + $0x1c] sm:$0xf]
        %s453 = scalar_lea.vmem [#allocation8], 48
        %v454 = vld [vmem:[%s453] sm:$0xf]
        %v455 = vld [vmem:[%s453 + $0x4] sm:$0xf]
        %v456 = vld [vmem:[%s453 + $0x8] sm:$0xf]
        %v457 = vld [vmem:[%s453 + $0xc] sm:$0xf]
        %v458 = vld [vmem:[%s453 + $0x10] sm:$0xf]
        %v459 = vld [vmem:[%s453 + $0x14] sm:$0xf]
        %v460 = vld [vmem:[%s453 + $0x18] sm:$0xf]
        %v461 = vld [vmem:[%s453 + $0x1c] sm:$0xf]
        %v462 = vld [vmem:[%s453 + $0x20] sm:$0xf]
        %v463 = vld [vmem:[%s453 + $0x24] sm:$0xf]
        %v464 = vld [vmem:[%s453 + $0x28] sm:$0xf]
        %v465 = vld [vmem:[%s453 + $0x2c] sm:$0xf]
        %v474 = vunpack.c.l.b16 %v445
        %v475 = vunpack.c.l.b16 %v446
        %v476 = vunpack.c.l.b16 %v447
        %v477 = vunpack.c.l.b16 %v448
        %v478 = vunpack.c.l.b16 %v449
        %v479 = vunpack.c.l.b16 %v450
        %v480 = vunpack.c.l.b16 %v451
        %v481 = vunpack.c.l.b16 %v452
        %v482 = vpack.c.b16 %v475, %v474
        %v483 = vpack.c.b16 %v477, %v476
        %v484 = vpack.c.b16 %v479, %v478
        %v485 = vpack.c.b16 %v481, %v480
        %v498 = vunpack.c.l.b16 %v454
        %v499 = vunpack.c.l.b16 %v455
        %v500 = vunpack.c.l.b16 %v456
        %v501 = vunpack.c.l.b16 %v457
        %v502 = vunpack.c.l.b16 %v458
        %v503 = vunpack.c.l.b16 %v459
        %v504 = vunpack.c.l.b16 %v460
        %v505 = vunpack.c.l.b16 %v461
        %v506 = vunpack.c.l.b16 %v462
        %v507 = vunpack.c.l.b16 %v463
        %v508 = vunpack.c.l.b16 %v464
        %v509 = vunpack.c.l.b16 %v465
        %v510 = vpack.c.b16 %v499, %v498
        %v511 = vpack.c.b16 %v501, %v500
        %v512 = vpack.c.b16 %v503, %v502
        %v513 = vpack.c.b16 %v505, %v504
        %v514 = vpack.c.b16 %v507, %v506
        %v515 = vpack.c.b16 %v509, %v508
        %vm522 = vcmask 785408
        %v524 = vsel %vm522, %v482, 0
        %v527 = vsel %vm522, %v483, 0
        %v530 = vsel %vm522, %v484, 0
        %v533 = vsel %vm522, %v485, 0
        %535 = vmatprep.subr.bf16.mxu0 0
        %536 = vmatpush1.bf16.msra.mxu0 %v510
        %537 = vmatprep.subr.bf16.mxu0 0
        %538 = vmatpush1.bf16.msra.mxu0 %v511
        %539 = vmatprep.subr.bf16.mxu0 0
        %540 = vmatpush1.bf16.msra.mxu0 %v512
        %541 = vmatprep.subr.bf16.mxu0 0
        %542 = vmatpush1.bf16.msra.mxu0 %v513
        %543 = vmatprep.subr.bf16.mxu0 0
        %544 = vmatpush1.bf16.msra.mxu0 %v514
        %545 = vmatprep.subr.bf16.mxu0 0
        %546 = vmatpush1.bf16.msra.mxu0 %v515
        %547 = vmatprep.subr.bf16.mxu0 0
        %548 = vmatpush1.bf16.msra.mxu0 0
        %549 = vmatprep.subr.bf16.mxu0 0
        %550 = vmatpush1.bf16.msra.mxu0 0
        %551 = vmatprep.subr.bf16.mxu0 0
        %552 = vmatpush1.bf16.msra.mxu0 0
        %553 = vmatprep.subr.bf16.mxu0 0
        %554 = vmatpush1.bf16.msra.mxu0 0
        %555 = vmatprep.subr.bf16.mxu0 0
        %556 = vmatpush1.bf16.msra.mxu0 0
        %557 = vmatprep.subr.bf16.mxu0 0
        %558 = vmatpush1.bf16.msra.mxu0 0
        %559 = vmatprep.subr.bf16.mxu0 0
        %560 = vmatpush1.bf16.msra.mxu0 0
        %561 = vmatprep.subr.bf16.mxu0 0
        %562 = vmatpush1.bf16.msra.mxu0 0
        %563 = vmatprep.subr.bf16.mxu0 0
        %564 = vmatpush1.bf16.msra.mxu0 0
        %565 = vmatprep.subr.bf16.mxu0 0
        %566 = vmatpush1.bf16.msra.mxu0 0
        %567 = vmatprep.mubr.bf16.mxu0 0
        %568 = vmatmul.mubr.bf16.gmra.mrb[0].mxu0 %v524
        %v569 = vpop.f32.mrb[0].mxu0
        %v570 = vadd.f32 0.0, %v569
        %v571 = vpop.f32.mrb[0].mxu0
        %v572 = vpop.f32.mrb[0].mxu0
        %v573 = vadd.f32 0.0, %v572
        %v574 = vpop.f32.mrb[0].mxu0
        %575 = vmatprep.mubr.bf16.mxu0 0
        %576 = vmatmul.mubr.bf16.gmra.mrb[0].mxu0 %v527
        %v577 = vpop.f32.mrb[0].mxu0
        %v578 = vadd.f32 0.0, %v577
        %v579 = vpop.f32.mrb[0].mxu0
        %v580 = vpop.f32.mrb[0].mxu0
        %v581 = vadd.f32 0.0, %v580
        %v582 = vpop.f32.mrb[0].mxu0
        %583 = vmatprep.mubr.bf16.mxu0 0
        %584 = vmatmul.mubr.bf16.gmra.mrb[0].mxu0 %v530
        %v585 = vpop.f32.mrb[0].mxu0
        %v586 = vadd.f32 0.0, %v585
        %v587 = vpop.f32.mrb[0].mxu0
        %v588 = vpop.f32.mrb[0].mxu0
        %v589 = vadd.f32 0.0, %v588
        %v590 = vpop.f32.mrb[0].mxu0
        %591 = vmatprep.mubr.bf16.mxu0 0
        %592 = vmatmul.mubr.bf16.gmra.mrb[0].mxu0 %v533
        %v593 = vpop.f32.mrb[0].mxu0
        %v594 = vadd.f32 0.0, %v593
        %v595 = vpop.f32.mrb[0].mxu0
        %v596 = vpop.f32.mrb[0].mxu0
        %v597 = vadd.f32 0.0, %v596
        %v598 = vpop.f32.mrb[0].mxu0
        %599 = vdwg.mxu0
        %v608 = vunpack.c.l.b16 %v420
        %v609 = vunpack.c.l.b16 %v421
        %v610 = vunpack.c.l.b16 %v422
        %v611 = vunpack.c.l.b16 %v423
        %v612 = vunpack.c.l.b16 %v424
        %v613 = vunpack.c.l.b16 %v425
        %v614 = vunpack.c.l.b16 %v426
        %v615 = vunpack.c.l.b16 %v427
        %v616 = vpack.c.b16 %v609, %v608
        %v617 = vpack.c.b16 %v611, %v610
        %v618 = vpack.c.b16 %v613, %v612
        %v619 = vpack.c.b16 %v615, %v614
        %v632 = vunpack.c.l.b16 %v428
        %v633 = vunpack.c.l.b16 %v429
        %v634 = vunpack.c.l.b16 %v430
        %v635 = vunpack.c.l.b16 %v431
        %v636 = vunpack.c.l.b16 %v432
        %v637 = vunpack.c.l.b16 %v433
        %v638 = vunpack.c.l.b16 %v434
        %v639 = vunpack.c.l.b16 %v435
        %v640 = vunpack.c.l.b16 %v436
        %v641 = vunpack.c.l.b16 %v437
        %v642 = vunpack.c.l.b16 %v438
        %v643 = vunpack.c.l.b16 %v439
        %v644 = vpack.c.b16 %v633, %v632
        %v645 = vpack.c.b16 %v635, %v634
        %v646 = vpack.c.b16 %v637, %v636
        %v647 = vpack.c.b16 %v639, %v638
        %v648 = vpack.c.b16 %v641, %v640
        %v649 = vpack.c.b16 %v643, %v642
        %v657 = vsel %vm522, %v616, 0
        %v660 = vsel %vm522, %v617, 0
        %v663 = vsel %vm522, %v618, 0
        %v666 = vsel %vm522, %v619, 0
        %668 = vmatprep.subr.bf16.mxu0 0
        %669 = vmatpush1.bf16.msra.mxu0 %v644
        %670 = vmatprep.subr.bf16.mxu0 0
        %671 = vmatpush1.bf16.msra.mxu0 %v645
        %672 = vmatprep.subr.bf16.mxu0 0
        %673 = vmatpush1.bf16.msra.mxu0 %v646
        %674 = vmatprep.subr.bf16.mxu0 0
        %675 = vmatpush1.bf16.msra.mxu0 %v647
        %676 = vmatprep.subr.bf16.mxu0 0
        %677 = vmatpush1.bf16.msra.mxu0 %v648
        %678 = vmatprep.subr.bf16.mxu0 0
        %679 = vmatpush1.bf16.msra.mxu0 %v649
        %680 = vmatprep.subr.bf16.mxu0 0
        %681 = vmatpush1.bf16.msra.mxu0 0
        %682 = vmatprep.subr.bf16.mxu0 0
        %683 = vmatpush1.bf16.msra.mxu0 0
        %684 = vmatprep.subr.bf16.mxu0 0
        %685 = vmatpush1.bf16.msra.mxu0 0
        %686 = vmatprep.subr.bf16.mxu0 0
        %687 = vmatpush1.bf16.msra.mxu0 0
        %688 = vmatprep.subr.bf16.mxu0 0
        %689 = vmatpush1.bf16.msra.mxu0 0
        %690 = vmatprep.subr.bf16.mxu0 0
        %691 = vmatpush1.bf16.msra.mxu0 0
        %692 = vmatprep.subr.bf16.mxu0 0
        %693 = vmatpush1.bf16.msra.mxu0 0
        %694 = vmatprep.subr.bf16.mxu0 0
        %695 = vmatpush1.bf16.msra.mxu0 0
        %696 = vmatprep.subr.bf16.mxu0 0
        %697 = vmatpush1.bf16.msra.mxu0 0
        %698 = vmatprep.subr.bf16.mxu0 0
        %699 = vmatpush1.bf16.msra.mxu0 0
        %700 = vmatprep.mubr.bf16.mxu0 0
        %701 = vmatmul.mubr.bf16.gmra.mrb[0].mxu0 %v657
        %v702 = vpop.f32.mrb[0].mxu0
        %v703 = vadd.f32 %v570, %v702
        %v704 = vpop.f32.mrb[0].mxu0
        %v705 = vpop.f32.mrb[0].mxu0
        %v706 = vadd.f32 %v573, %v705
        %v707 = vpop.f32.mrb[0].mxu0
        %708 = vmatprep.mubr.bf16.mxu0 0
        %709 = vmatmul.mubr.bf16.gmra.mrb[0].mxu0 %v660
        %v710 = vpop.f32.mrb[0].mxu0
        %v711 = vadd.f32 %v578, %v710
        %v712 = vpop.f32.mrb[0].mxu0
        %v713 = vpop.f32.mrb[0].mxu0
        %v714 = vadd.f32 %v581, %v713
        %v715 = vpop.f32.mrb[0].mxu0
        %716 = vmatprep.mubr.bf16.mxu0 0
        %717 = vmatmul.mubr.bf16.gmra.mrb[0].mxu0 %v663
        %v718 = vpop.f32.mrb[0].mxu0
        %v719 = vadd.f32 %v586, %v718
        %v720 = vpop.f32.mrb[0].mxu0
        %v721 = vpop.f32.mrb[0].mxu0
        %v722 = vadd.f32 %v589, %v721
        %v723 = vpop.f32.mrb[0].mxu0
        %724 = vmatprep.mubr.bf16.mxu0 0
        %725 = vmatmul.mubr.bf16.gmra.mrb[0].mxu0 %v666
        %v726 = vpop.f32.mrb[0].mxu0
        %v727 = vadd.f32 %v594, %v726
        %v728 = vpop.f32.mrb[0].mxu0
        %v729 = vpop.f32.mrb[0].mxu0
        %v730 = vadd.f32 %v597, %v729
        %v731 = vpop.f32.mrb[0].mxu0
        %732 = vdwg.mxu0
        %s733 = sadd.s32 %s415, 16
        %s734 = sshra.s32 %s733, 3
        %s735 = sand.u32 %s733, 7
        %s736 = smul.addr %s734, 4
        %s737 = scalar_lea.vmem %s348, %s736 [#allocation2]
        %v738 = vld [vmem:[%s737] sm:$0xf]
        %v739 = vld [vmem:[%s737 + $0x4] sm:$0xf]
        %v740 = vld [vmem:[%s737 + $0x8] sm:$0xf]
        %v741 = vld [vmem:[%s737 + $0xc] sm:$0xf]
        %v742 = vld [vmem:[%s737 + $0x10] sm:$0xf]
        %v743 = vld [vmem:[%s737 + $0x14] sm:$0xf]
        %v744 = vld [vmem:[%s737 + $0x18] sm:$0xf]
        %v745 = vld [vmem:[%s737 + $0x1c] sm:$0xf]
        %s746 = scalar_lea.vmem [#allocation8], 96
        %v747 = vld [vmem:[%s746] sm:$0xf]
        %v748 = vld [vmem:[%s746 + $0x4] sm:$0xf]
        %v749 = vld [vmem:[%s746 + $0x8] sm:$0xf]
        %v750 = vld [vmem:[%s746 + $0xc] sm:$0xf]
        %v751 = vld [vmem:[%s746 + $0x10] sm:$0xf]
        %v752 = vld [vmem:[%s746 + $0x14] sm:$0xf]
        %v753 = vld [vmem:[%s746 + $0x18] sm:$0xf]
        %v754 = vld [vmem:[%s746 + $0x1c] sm:$0xf]
        %v755 = vld [vmem:[%s746 + $0x20] sm:$0xf]
        %v756 = vld [vmem:[%s746 + $0x24] sm:$0xf]
        %v757 = vld [vmem:[%s746 + $0x28] sm:$0xf]
        %v758 = vld [vmem:[%s746 + $0x2c] sm:$0xf]
        %v767 = vunpack.c.l.b16 %v738
        %v768 = vunpack.c.l.b16 %v739
        %v769 = vunpack.c.l.b16 %v740
        %v770 = vunpack.c.l.b16 %v741
        %v771 = vunpack.c.l.b16 %v742
        %v772 = vunpack.c.l.b16 %v743
        %v773 = vunpack.c.l.b16 %v744
        %v774 = vunpack.c.l.b16 %v745
        %v775 = vpack.c.b16 %v768, %v767
        %v776 = vpack.c.b16 %v770, %v769
        %v777 = vpack.c.b16 %v772, %v771
        %v778 = vpack.c.b16 %v774, %v773
        %v791 = vunpack.c.l.b16 %v747
        %v792 = vunpack.c.l.b16 %v748
        %v793 = vunpack.c.l.b16 %v749
        %v794 = vunpack.c.l.b16 %v750
        %v795 = vunpack.c.l.b16 %v751
        %v796 = vunpack.c.l.b16 %v752
        %v797 = vunpack.c.l.b16 %v753
        %v798 = vunpack.c.l.b16 %v754
        %v799 = vunpack.c.l.b16 %v755
        %v800 = vunpack.c.l.b16 %v756
        %v801 = vunpack.c.l.b16 %v757
        %v802 = vunpack.c.l.b16 %v758
        %v803 = vpack.c.b16 %v792, %v791
        %v804 = vpack.c.b16 %v794, %v793
        %v805 = vpack.c.b16 %v796, %v795
        %v806 = vpack.c.b16 %v798, %v797
        %v807 = vpack.c.b16 %v800, %v799
        %v808 = vpack.c.b16 %v802, %v801
        %v816 = vsel %vm522, %v775, 0
        %v819 = vsel %vm522, %v776, 0
        %v822 = vsel %vm522, %v777, 0
        %v825 = vsel %vm522, %v778, 0
        %827 = vmatprep.subr.bf16.mxu0 0
        %828 = vmatpush1.bf16.msra.mxu0 %v803
        %829 = vmatprep.subr.bf16.mxu0 0
        %830 = vmatpush1.bf16.msra.mxu0 %v804
        %831 = vmatprep.subr.bf16.mxu0 0
        %832 = vmatpush1.bf16.msra.mxu0 %v805
        %833 = vmatprep.subr.bf16.mxu0 0
        %834 = vmatpush1.bf16.msra.mxu0 %v806
        %835 = vmatprep.subr.bf16.mxu0 0
        %836 = vmatpush1.bf16.msra.mxu0 %v807
        %837 = vmatprep.subr.bf16.mxu0 0
        %838 = vmatpush1.bf16.msra.mxu0 %v808
        %839 = vmatprep.subr.bf16.mxu0 0
        %840 = vmatpush1.bf16.msra.mxu0 0
        %841 = vmatprep.subr.bf16.mxu0 0
        %842 = vmatpush1.bf16.msra.mxu0 0
        %843 = vmatprep.subr.bf16.mxu0 0
        %844 = vmatpush1.bf16.msra.mxu0 0
        %845 = vmatprep.subr.bf16.mxu0 0
        %846 = vmatpush1.bf16.msra.mxu0 0
        %847 = vmatprep.subr.bf16.mxu0 0
        %848 = vmatpush1.bf16.msra.mxu0 0
        %849 = vmatprep.subr.bf16.mxu0 0
        %850 = vmatpush1.bf16.msra.mxu0 0
        %851 = vmatprep.subr.bf16.mxu0 0
        %852 = vmatpush1.bf16.msra.mxu0 0
        %853 = vmatprep.subr.bf16.mxu0 0
        %854 = vmatpush1.bf16.msra.mxu0 0
        %855 = vmatprep.subr.bf16.mxu0 0
        %856 = vmatpush1.bf16.msra.mxu0 0
        %857 = vmatprep.subr.bf16.mxu0 0
        %858 = vmatpush1.bf16.msra.mxu0 0
        %859 = vmatprep.mubr.bf16.mxu0 0
        %860 = vmatmul.mubr.bf16.gmra.mrb[0].mxu0 %v816
        %v861 = vpop.f32.mrb[0].mxu0
        %v862 = vadd.f32 0.0, %v861
        %v863 = vpop.f32.mrb[0].mxu0
        %v864 = vpop.f32.mrb[0].mxu0
        %v865 = vadd.f32 0.0, %v864
        %v866 = vpop.f32.mrb[0].mxu0
        %867 = vmatprep.mubr.bf16.mxu0 0
        %868 = vmatmul.mubr.bf16.gmra.mrb[0].mxu0 %v819
        %v869 = vpop.f32.mrb[0].mxu0
        %v870 = vadd.f32 0.0, %v869
        %v871 = vpop.f32.mrb[0].mxu0
        %v872 = vpop.f32.mrb[0].mxu0
        %v873 = vadd.f32 0.0, %v872
        %v874 = vpop.f32.mrb[0].mxu0
        %875 = vmatprep.mubr.bf16.mxu0 0
        %876 = vmatmul.mubr.bf16.gmra.mrb[0].mxu0 %v822
        %v877 = vpop.f32.mrb[0].mxu0
        %v878 = vadd.f32 0.0, %v877
        %v879 = vpop.f32.mrb[0].mxu0
        %v880 = vpop.f32.mrb[0].mxu0
        %v881 = vadd.f32 0.0, %v880
        %v882 = vpop.f32.mrb[0].mxu0
        %883 = vmatprep.mubr.bf16.mxu0 0
        %884 = vmatmul.mubr.bf16.gmra.mrb[0].mxu0 %v825
        %v885 = vpop.f32.mrb[0].mxu0
        %v886 = vadd.f32 0.0, %v885
        %v887 = vpop.f32.mrb[0].mxu0
        %v888 = vpop.f32.mrb[0].mxu0
        %v889 = vadd.f32 0.0, %v888
        %v890 = vpop.f32.mrb[0].mxu0
        %891 = vdwg.mxu0
        %v892 = vadd.f32 %v703, %v862
        %v893 = vadd.f32 %v706, %v865
        %v894 = vadd.f32 %v711, %v870
        %v895 = vadd.f32 %v714, %v873
        %v896 = vadd.f32 %v719, %v878
        %v897 = vadd.f32 %v722, %v881
        %v898 = vadd.f32 %v727, %v886
        %v899 = vadd.f32 %v730, %v889
        %s900 = smul.addr %s416, 4
        %s901 = scalar_lea.vmem %s357, %s900 [#allocation5]
        %v902 = vld [vmem:[%s901] sm:$0xf]
        %v903 = vld [vmem:[%s901 + $0x4] sm:$0xf]
        %v904 = vld [vmem:[%s901 + $0x8] sm:$0xf]
        %v905 = vld [vmem:[%s901 + $0xc] sm:$0xf]
        %v906 = vld [vmem:[%s901 + $0x10] sm:$0xf]
        %v907 = vld [vmem:[%s901 + $0x14] sm:$0xf]
        %v908 = vld [vmem:[%s901 + $0x18] sm:$0xf]
        %v909 = vld [vmem:[%s901 + $0x1c] sm:$0xf]
        %s910 = scalar_lea.vmem [#allocation8], 144
        %v911 = vld [vmem:[%s910] sm:$0xf]
        %v912 = vld [vmem:[%s910 + $0x4] sm:$0xf]
        %v913 = vld [vmem:[%s910 + $0x8] sm:$0xf]
        %v914 = vld [vmem:[%s910 + $0xc] sm:$0xf]
        %v915 = vld [vmem:[%s910 + $0x10] sm:$0xf]
        %v916 = vld [vmem:[%s910 + $0x14] sm:$0xf]
        %v917 = vld [vmem:[%s910 + $0x18] sm:$0xf]
        %v918 = vld [vmem:[%s910 + $0x1c] sm:$0xf]
        %v919 = vld [vmem:[%s910 + $0x20] sm:$0xf]
        %v920 = vld [vmem:[%s910 + $0x24] sm:$0xf]
        %v921 = vld [vmem:[%s910 + $0x28] sm:$0xf]
        %v922 = vld [vmem:[%s910 + $0x2c] sm:$0xf]
        %v931 = vunpack.c.l.b16 %v902
        %v932 = vunpack.c.l.b16 %v903
        %v933 = vunpack.c.l.b16 %v904
        %v934 = vunpack.c.l.b16 %v905
        %v935 = vunpack.c.l.b16 %v906
        %v936 = vunpack.c.l.b16 %v907
        %v937 = vunpack.c.l.b16 %v908
        %v938 = vunpack.c.l.b16 %v909
        %v939 = vpack.c.b16 %v932, %v931
        %v940 = vpack.c.b16 %v934, %v933
        %v941 = vpack.c.b16 %v936, %v935
        %v942 = vpack.c.b16 %v938, %v937
        %v955 = vunpack.c.l.b16 %v911
        %v956 = vunpack.c.l.b16 %v912
        %v957 = vunpack.c.l.b16 %v913
        %v958 = vunpack.c.l.b16 %v914
        %v959 = vunpack.c.l.b16 %v915
        %v960 = vunpack.c.l.b16 %v916
        %v961 = vunpack.c.l.b16 %v917
        %v962 = vunpack.c.l.b16 %v918
        %v963 = vunpack.c.l.b16 %v919
        %v964 = vunpack.c.l.b16 %v920
        %v965 = vunpack.c.l.b16 %v921
        %v966 = vunpack.c.l.b16 %v922
        %v967 = vpack.c.b16 %v956, %v955
        %v968 = vpack.c.b16 %v958, %v957
        %v969 = vpack.c.b16 %v960, %v959
        %v970 = vpack.c.b16 %v962, %v961
        %v971 = vpack.c.b16 %v964, %v963
        %v972 = vpack.c.b16 %v966, %v965
        %v980 = vsel %vm522, %v939, 0
        %v983 = vsel %vm522, %v940, 0
        %v986 = vsel %vm522, %v941, 0
        %v989 = vsel %vm522, %v942, 0
        %991 = vmatprep.subr.bf16.mxu0 0
        %992 = vmatpush1.bf16.msra.mxu0 %v967
        %993 = vmatprep.subr.bf16.mxu0 0
        %994 = vmatpush1.bf16.msra.mxu0 %v968
        %995 = vmatprep.subr.bf16.mxu0 0
        %996 = vmatpush1.bf16.msra.mxu0 %v969
        %997 = vmatprep.subr.bf16.mxu0 0
        %998 = vmatpush1.bf16.msra.mxu0 %v970
        %999 = vmatprep.subr.bf16.mxu0 0
        %1000 = vmatpush1.bf16.msra.mxu0 %v971
        %1001 = vmatprep.subr.bf16.mxu0 0
        %1002 = vmatpush1.bf16.msra.mxu0 %v972
        %1003 = vmatprep.subr.bf16.mxu0 0
        %1004 = vmatpush1.bf16.msra.mxu0 0
        %1005 = vmatprep.subr.bf16.mxu0 0
        %1006 = vmatpush1.bf16.msra.mxu0 0
        %1007 = vmatprep.subr.bf16.mxu0 0
        %1008 = vmatpush1.bf16.msra.mxu0 0
        %1009 = vmatprep.subr.bf16.mxu0 0
        %1010 = vmatpush1.bf16.msra.mxu0 0
        %1011 = vmatprep.subr.bf16.mxu0 0
        %1012 = vmatpush1.bf16.msra.mxu0 0
        %1013 = vmatprep.subr.bf16.mxu0 0
        %1014 = vmatpush1.bf16.msra.mxu0 0
        %1015 = vmatprep.subr.bf16.mxu0 0
        %1016 = vmatpush1.bf16.msra.mxu0 0
        %1017 = vmatprep.subr.bf16.mxu0 0
        %1018 = vmatpush1.bf16.msra.mxu0 0
        %1019 = vmatprep.subr.bf16.mxu0 0
        %1020 = vmatpush1.bf16.msra.mxu0 0
        %1021 = vmatprep.subr.bf16.mxu0 0
        %1022 = vmatpush1.bf16.msra.mxu0 0
        %1023 = vmatprep.mubr.bf16.mxu0 0
        %1024 = vmatmul.mubr.bf16.gmra.mrb[0].mxu0 %v980
        %v1025 = vpop.f32.mrb[0].mxu0
        %v1026 = vadd.f32 0.0, %v1025
        %v1027 = vpop.f32.mrb[0].mxu0
        %v1028 = vpop.f32.mrb[0].mxu0
        %v1029 = vadd.f32 0.0, %v1028
        %v1030 = vpop.f32.mrb[0].mxu0
        %1031 = vmatprep.mubr.bf16.mxu0 0
        %1032 = vmatmul.mubr.bf16.gmra.mrb[0].mxu0 %v983
        %v1033 = vpop.f32.mrb[0].mxu0
        %v1034 = vadd.f32 0.0, %v1033
        %v1035 = vpop.f32.mrb[0].mxu0
        %v1036 = vpop.f32.mrb[0].mxu0
        %v1037 = vadd.f32 0.0, %v1036
        %v1038 = vpop.f32.mrb[0].mxu0
        %1039 = vmatprep.mubr.bf16.mxu0 0
        %1040 = vmatmul.mubr.bf16.gmra.mrb[0].mxu0 %v986
        %v1041 = vpop.f32.mrb[0].mxu0
        %v1042 = vadd.f32 0.0, %v1041
        %v1043 = vpop.f32.mrb[0].mxu0
        %v1044 = vpop.f32.mrb[0].mxu0
        %v1045 = vadd.f32 0.0, %v1044
        %v1046 = vpop.f32.mrb[0].mxu0
        %1047 = vmatprep.mubr.bf16.mxu0 0
        %1048 = vmatmul.mubr.bf16.gmra.mrb[0].mxu0 %v989
        %v1049 = vpop.f32.mrb[0].mxu0
        %v1050 = vadd.f32 0.0, %v1049
        %v1051 = vpop.f32.mrb[0].mxu0
        %v1052 = vpop.f32.mrb[0].mxu0
        %v1053 = vadd.f32 0.0, %v1052
        %v1054 = vpop.f32.mrb[0].mxu0
        %1055 = vdwg.mxu0
        %v1056 = vadd.f32 %v892, %v1026
        %v1057 = vadd.f32 %v893, %v1029
        %v1058 = vadd.f32 %v894, %v1034
        %v1059 = vadd.f32 %v895, %v1037
        %v1060 = vadd.f32 %v896, %v1042
        %v1061 = vadd.f32 %v897, %v1045
        %v1062 = vadd.f32 %v898, %v1050
        %v1063 = vadd.f32 %v899, %v1053
        %s1064 = smul.addr %s441, 4
        %s1065 = scalar_lea.vmem %s357, %s1064 [#allocation5]
        %v1066 = vld [vmem:[%s1065] sm:$0xf]
        %v1067 = vld [vmem:[%s1065 + $0x4] sm:$0xf]
        %v1068 = vld [vmem:[%s1065 + $0x8] sm:$0xf]
        %v1069 = vld [vmem:[%s1065 + $0xc] sm:$0xf]
        %v1070 = vld [vmem:[%s1065 + $0x10] sm:$0xf]
        %v1071 = vld [vmem:[%s1065 + $0x14] sm:$0xf]
        %v1072 = vld [vmem:[%s1065 + $0x18] sm:$0xf]
        %v1073 = vld [vmem:[%s1065 + $0x1c] sm:$0xf]
        %s1074 = scalar_lea.vmem [#allocation8], 192
        %v1075 = vld [vmem:[%s1074] sm:$0xf]
        %v1076 = vld [vmem:[%s1074 + $0x4] sm:$0xf]
        %v1077 = vld [vmem:[%s1074 + $0x8] sm:$0xf]
        %v1078 = vld [vmem:[%s1074 + $0xc] sm:$0xf]
        %v1079 = vld [vmem:[%s1074 + $0x10] sm:$0xf]
        %v1080 = vld [vmem:[%s1074 + $0x14] sm:$0xf]
        %v1081 = vld [vmem:[%s1074 + $0x18] sm:$0xf]
        %v1082 = vld [vmem:[%s1074 + $0x1c] sm:$0xf]
        %v1083 = vld [vmem:[%s1074 + $0x20] sm:$0xf]
        %v1084 = vld [vmem:[%s1074 + $0x24] sm:$0xf]
        %v1085 = vld [vmem:[%s1074 + $0x28] sm:$0xf]
        %v1086 = vld [vmem:[%s1074 + $0x2c] sm:$0xf]
        %v1095 = vunpack.c.l.b16 %v1066
        %v1096 = vunpack.c.l.b16 %v1067
        %v1097 = vunpack.c.l.b16 %v1068
        %v1098 = vunpack.c.l.b16 %v1069
        %v1099 = vunpack.c.l.b16 %v1070
        %v1100 = vunpack.c.l.b16 %v1071
        %v1101 = vunpack.c.l.b16 %v1072
        %v1102 = vunpack.c.l.b16 %v1073
        %v1103 = vpack.c.b16 %v1096, %v1095
        %v1104 = vpack.c.b16 %v1098, %v1097
        %v1105 = vpack.c.b16 %v1100, %v1099
        %v1106 = vpack.c.b16 %v1102, %v1101
        %v1119 = vunpack.c.l.b16 %v1075
        %v1120 = vunpack.c.l.b16 %v1076
        %v1121 = vunpack.c.l.b16 %v1077
        %v1122 = vunpack.c.l.b16 %v1078
        %v1123 = vunpack.c.l.b16 %v1079
        %v1124 = vunpack.c.l.b16 %v1080
        %v1125 = vunpack.c.l.b16 %v1081
        %v1126 = vunpack.c.l.b16 %v1082
        %v1127 = vunpack.c.l.b16 %v1083
        %v1128 = vunpack.c.l.b16 %v1084
        %v1129 = vunpack.c.l.b16 %v1085
        %v1130 = vunpack.c.l.b16 %v1086
        %v1131 = vpack.c.b16 %v1120, %v1119
        %v1132 = vpack.c.b16 %v1122, %v1121
        %v1133 = vpack.c.b16 %v1124, %v1123
        %v1134 = vpack.c.b16 %v1126, %v1125
        %v1135 = vpack.c.b16 %v1128, %v1127
        %v1136 = vpack.c.b16 %v1130, %v1129
        %v1144 = vsel %vm522, %v1103, 0
        %v1147 = vsel %vm522, %v1104, 0
        %v1150 = vsel %vm522, %v1105, 0
        %v1153 = vsel %vm522, %v1106, 0
        %1155 = vmatprep.subr.bf16.mxu0 0
        %1156 = vmatpush1.bf16.msra.mxu0 %v1131
        %1157 = vmatprep.subr.bf16.mxu0 0
        %1158 = vmatpush1.bf16.msra.mxu0 %v1132
        %1159 = vmatprep.subr.bf16.mxu0 0
        %1160 = vmatpush1.bf16.msra.mxu0 %v1133
        %1161 = vmatprep.subr.bf16.mxu0 0
        %1162 = vmatpush1.bf16.msra.mxu0 %v1134
        %1163 = vmatprep.subr.bf16.mxu0 0
        %1164 = vmatpush1.bf16.msra.mxu0 %v1135
        %1165 = vmatprep.subr.bf16.mxu0 0
        %1166 = vmatpush1.bf16.msra.mxu0 %v1136
        %1167 = vmatprep.subr.bf16.mxu0 0
        %1168 = vmatpush1.bf16.msra.mxu0 0
        %1169 = vmatprep.subr.bf16.mxu0 0
        %1170 = vmatpush1.bf16.msra.mxu0 0
        %1171 = vmatprep.subr.bf16.mxu0 0
        %1172 = vmatpush1.bf16.msra.mxu0 0
        %1173 = vmatprep.subr.bf16.mxu0 0
        %1174 = vmatpush1.bf16.msra.mxu0 0
        %1175 = vmatprep.subr.bf16.mxu0 0
        %1176 = vmatpush1.bf16.msra.mxu0 0
        %1177 = vmatprep.subr.bf16.mxu0 0
        %1178 = vmatpush1.bf16.msra.mxu0 0
        %1179 = vmatprep.subr.bf16.mxu0 0
        %1180 = vmatpush1.bf16.msra.mxu0 0
        %1181 = vmatprep.subr.bf16.mxu0 0
        %1182 = vmatpush1.bf16.msra.mxu0 0
        %1183 = vmatprep.subr.bf16.mxu0 0
        %1184 = vmatpush1.bf16.msra.mxu0 0
        %1185 = vmatprep.subr.bf16.mxu0 0
        %1186 = vmatpush1.bf16.msra.mxu0 0
        %1187 = vmatprep.mubr.bf16.mxu0 0
        %1188 = vmatmul.mubr.bf16.gmra.mrb[0].mxu0 %v1144
        %v1189 = vpop.f32.mrb[0].mxu0
        %v1190 = vadd.f32 0.0, %v1189
        %v1191 = vpop.f32.mrb[0].mxu0
        %v1192 = vpop.f32.mrb[0].mxu0
        %v1193 = vadd.f32 0.0, %v1192
        %v1194 = vpop.f32.mrb[0].mxu0
        %1195 = vmatprep.mubr.bf16.mxu0 0
        %1196 = vmatmul.mubr.bf16.gmra.mrb[0].mxu0 %v1147
        %v1197 = vpop.f32.mrb[0].mxu0
        %v1198 = vadd.f32 0.0, %v1197
        %v1199 = vpop.f32.mrb[0].mxu0
        %v1200 = vpop.f32.mrb[0].mxu0
        %v1201 = vadd.f32 0.0, %v1200
        %v1202 = vpop.f32.mrb[0].mxu0
        %1203 = vmatprep.mubr.bf16.mxu0 0
        %1204 = vmatmul.mubr.bf16.gmra.mrb[0].mxu0 %v1150
        %v1205 = vpop.f32.mrb[0].mxu0
        %v1206 = vadd.f32 0.0, %v1205
        %v1207 = vpop.f32.mrb[0].mxu0
        %v1208 = vpop.f32.mrb[0].mxu0
        %v1209 = vadd.f32 0.0, %v1208
        %v1210 = vpop.f32.mrb[0].mxu0
        %1211 = vmatprep.mubr.bf16.mxu0 0
        %1212 = vmatmul.mubr.bf16.gmra.mrb[0].mxu0 %v1153
        %v1213 = vpop.f32.mrb[0].mxu0
        %v1214 = vadd.f32 0.0, %v1213
        %v1215 = vpop.f32.mrb[0].mxu0
        %v1216 = vpop.f32.mrb[0].mxu0
        %v1217 = vadd.f32 0.0, %v1216
        %v1218 = vpop.f32.mrb[0].mxu0
        %1219 = vdwg.mxu0
        %v1220 = vadd.f32 %v1056, %v1190
        %v1221 = vadd.f32 %v1057, %v1193
        %v1222 = vadd.f32 %v1058, %v1198
        %v1223 = vadd.f32 %v1059, %v1201
        %v1224 = vadd.f32 %v1060, %v1206
        %v1225 = vadd.f32 %v1061, %v1209
        %v1226 = vadd.f32 %v1062, %v1214
        %v1227 = vadd.f32 %v1063, %v1217
        %s1228 = smul.addr %s734, 4
        %s1229 = scalar_lea.vmem %s357, %s1228 [#allocation5]
        %v1230 = vld [vmem:[%s1229] sm:$0xf]
        %v1231 = vld [vmem:[%s1229 + $0x4] sm:$0xf]
        %v1232 = vld [vmem:[%s1229 + $0x8] sm:$0xf]
        %v1233 = vld [vmem:[%s1229 + $0xc] sm:$0xf]
        %v1234 = vld [vmem:[%s1229 + $0x10] sm:$0xf]
        %v1235 = vld [vmem:[%s1229 + $0x14] sm:$0xf]
        %v1236 = vld [vmem:[%s1229 + $0x18] sm:$0xf]
        %v1237 = vld [vmem:[%s1229 + $0x1c] sm:$0xf]
        %s1238 = scalar_lea.vmem [#allocation8], 240
        %v1239 = vld [vmem:[%s1238] sm:$0xf]
        %v1240 = vld [vmem:[%s1238 + $0x4] sm:$0xf]
        %v1241 = vld [vmem:[%s1238 + $0x8] sm:$0xf]
        %v1242 = vld [vmem:[%s1238 + $0xc] sm:$0xf]
        %v1243 = vld [vmem:[%s1238 + $0x10] sm:$0xf]
        %v1244 = vld [vmem:[%s1238 + $0x14] sm:$0xf]
        %v1245 = vld [vmem:[%s1238 + $0x18] sm:$0xf]
        %v1246 = vld [vmem:[%s1238 + $0x1c] sm:$0xf]
        %v1247 = vld [vmem:[%s1238 + $0x20] sm:$0xf]
        %v1248 = vld [vmem:[%s1238 + $0x24] sm:$0xf]
        %v1249 = vld [vmem:[%s1238 + $0x28] sm:$0xf]
        %v1250 = vld [vmem:[%s1238 + $0x2c] sm:$0xf]
        %v1259 = vunpack.c.l.b16 %v1230
        %v1260 = vunpack.c.l.b16 %v1231
        %v1261 = vunpack.c.l.b16 %v1232
        %v1262 = vunpack.c.l.b16 %v1233
        %v1263 = vunpack.c.l.b16 %v1234
        %v1264 = vunpack.c.l.b16 %v1235
        %v1265 = vunpack.c.l.b16 %v1236
        %v1266 = vunpack.c.l.b16 %v1237
        %v1267 = vpack.c.b16 %v1260, %v1259
        %v1268 = vpack.c.b16 %v1262, %v1261
        %v1269 = vpack.c.b16 %v1264, %v1263
        %v1270 = vpack.c.b16 %v1266, %v1265
        %v1283 = vunpack.c.l.b16 %v1239
        %v1284 = vunpack.c.l.b16 %v1240
        %v1285 = vunpack.c.l.b16 %v1241
        %v1286 = vunpack.c.l.b16 %v1242
        %v1287 = vunpack.c.l.b16 %v1243
        %v1288 = vunpack.c.l.b16 %v1244
        %v1289 = vunpack.c.l.b16 %v1245
        %v1290 = vunpack.c.l.b16 %v1246
        %v1291 = vunpack.c.l.b16 %v1247
        %v1292 = vunpack.c.l.b16 %v1248
        %v1293 = vunpack.c.l.b16 %v1249
        %v1294 = vunpack.c.l.b16 %v1250
        %v1295 = vpack.c.b16 %v1284, %v1283
        %v1296 = vpack.c.b16 %v1286, %v1285
        %v1297 = vpack.c.b16 %v1288, %v1287
        %v1298 = vpack.c.b16 %v1290, %v1289
        %v1299 = vpack.c.b16 %v1292, %v1291
        %v1300 = vpack.c.b16 %v1294, %v1293
        %v1308 = vsel %vm522, %v1267, 0
        %v1311 = vsel %vm522, %v1268, 0
        %v1314 = vsel %vm522, %v1269, 0
        %v1317 = vsel %vm522, %v1270, 0
        %1319 = vmatprep.subr.bf16.mxu0 0
        %1320 = vmatpush1.bf16.msra.mxu0 %v1295
        %1321 = vmatprep.subr.bf16.mxu0 0
        %1322 = vmatpush1.bf16.msra.mxu0 %v1296
        %1323 = vmatprep.subr.bf16.mxu0 0
        %1324 = vmatpush1.bf16.msra.mxu0 %v1297
        %1325 = vmatprep.subr.bf16.mxu0 0
        %1326 = vmatpush1.bf16.msra.mxu0 %v1298
        %1327 = vmatprep.subr.bf16.mxu0 0
        %1328 = vmatpush1.bf16.msra.mxu0 %v1299
        %1329 = vmatprep.subr.bf16.mxu0 0
        %1330 = vmatpush1.bf16.msra.mxu0 %v1300
        %1331 = vmatprep.subr.bf16.mxu0 0
        %1332 = vmatpush1.bf16.msra.mxu0 0
        %1333 = vmatprep.subr.bf16.mxu0 0
        %1334 = vmatpush1.bf16.msra.mxu0 0
        %1335 = vmatprep.subr.bf16.mxu0 0
        %1336 = vmatpush1.bf16.msra.mxu0 0
        %1337 = vmatprep.subr.bf16.mxu0 0
        %1338 = vmatpush1.bf16.msra.mxu0 0
        %1339 = vmatprep.subr.bf16.mxu0 0
        %1340 = vmatpush1.bf16.msra.mxu0 0
        %1341 = vmatprep.subr.bf16.mxu0 0
        %1342 = vmatpush1.bf16.msra.mxu0 0
        %1343 = vmatprep.subr.bf16.mxu0 0
        %1344 = vmatpush1.bf16.msra.mxu0 0
        %1345 = vmatprep.subr.bf16.mxu0 0
        %1346 = vmatpush1.bf16.msra.mxu0 0
        %1347 = vmatprep.subr.bf16.mxu0 0
        %1348 = vmatpush1.bf16.msra.mxu0 0
        %1349 = vmatprep.subr.bf16.mxu0 0
        %1350 = vmatpush1.bf16.msra.mxu0 0
        %1351 = vmatprep.mubr.bf16.mxu0 0
        %1352 = vmatmul.mubr.bf16.gmra.mrb[0].mxu0 %v1308
        %v1353 = vpop.f32.mrb[0].mxu0
        %v1354 = vadd.f32 0.0, %v1353
        %v1355 = vpop.f32.mrb[0].mxu0
        %v1356 = vpop.f32.mrb[0].mxu0
        %v1357 = vadd.f32 0.0, %v1356
        %v1358 = vpop.f32.mrb[0].mxu0
        %1359 = vmatprep.mubr.bf16.mxu0 0
        %1360 = vmatmul.mubr.bf16.gmra.mrb[0].mxu0 %v1311
        %v1361 = vpop.f32.mrb[0].mxu0
        %v1362 = vadd.f32 0.0, %v1361
        %v1363 = vpop.f32.mrb[0].mxu0
        %v1364 = vpop.f32.mrb[0].mxu0
        %v1365 = vadd.f32 0.0, %v1364
        %v1366 = vpop.f32.mrb[0].mxu0
        %1367 = vmatprep.mubr.bf16.mxu0 0
        %1368 = vmatmul.mubr.bf16.gmra.mrb[0].mxu0 %v1314
        %v1369 = vpop.f32.mrb[0].mxu0
        %v1370 = vadd.f32 0.0, %v1369
        %v1371 = vpop.f32.mrb[0].mxu0
        %v1372 = vpop.f32.mrb[0].mxu0
        %v1373 = vadd.f32 0.0, %v1372
        %v1374 = vpop.f32.mrb[0].mxu0
        %1375 = vmatprep.mubr.bf16.mxu0 0
        %1376 = vmatmul.mubr.bf16.gmra.mrb[0].mxu0 %v1317
        %v1377 = vpop.f32.mrb[0].mxu0
        %v1378 = vadd.f32 0.0, %v1377
        %v1379 = vpop.f32.mrb[0].mxu0
        %v1380 = vpop.f32.mrb[0].mxu0
        %v1381 = vadd.f32 0.0, %v1380
        %v1382 = vpop.f32.mrb[0].mxu0
        %1383 = vdwg.mxu0
        %v1384 = vadd.f32 %v1220, %v1354
        %v1385 = vadd.f32 %v1221, %v1357
        %v1386 = vadd.f32 %v1222, %v1362
        %v1387 = vadd.f32 %v1223, %v1365
        %v1388 = vadd.f32 %v1224, %v1370
        %v1389 = vadd.f32 %v1225, %v1373
        %v1390 = vadd.f32 %v1226, %v1378
        %v1391 = vadd.f32 %v1227, %v1381
        %s1392 = smul.addr %s416, 4
        %s1393 = scalar_lea.vmem %s366, %s1392 [#allocation7]
        %v1394 = vld [vmem:[%s1393] sm:$0xf]
        %v1395 = vld [vmem:[%s1393 + $0x4] sm:$0xf]
        %v1396 = vld [vmem:[%s1393 + $0x8] sm:$0xf]
        %v1397 = vld [vmem:[%s1393 + $0xc] sm:$0xf]
        %v1398 = vld [vmem:[%s1393 + $0x10] sm:$0xf]
        %v1399 = vld [vmem:[%s1393 + $0x14] sm:$0xf]
        %v1400 = vld [vmem:[%s1393 + $0x18] sm:$0xf]
        %v1401 = vld [vmem:[%s1393 + $0x1c] sm:$0xf]
        %s1402 = scalar_lea.vmem [#allocation8], 288
        %v1403 = vld [vmem:[%s1402] sm:$0xf]
        %v1404 = vld [vmem:[%s1402 + $0x4] sm:$0xf]
        %v1405 = vld [vmem:[%s1402 + $0x8] sm:$0xf]
        %v1406 = vld [vmem:[%s1402 + $0xc] sm:$0xf]
        %v1407 = vld [vmem:[%s1402 + $0x10] sm:$0xf]
        %v1408 = vld [vmem:[%s1402 + $0x14] sm:$0xf]
        %v1409 = vld [vmem:[%s1402 + $0x18] sm:$0xf]
        %v1410 = vld [vmem:[%s1402 + $0x1c] sm:$0xf]
        %v1411 = vld [vmem:[%s1402 + $0x20] sm:$0xf]
        %v1412 = vld [vmem:[%s1402 + $0x24] sm:$0xf]
        %v1413 = vld [vmem:[%s1402 + $0x28] sm:$0xf]
        %v1414 = vld [vmem:[%s1402 + $0x2c] sm:$0xf]
        %v1423 = vunpack.c.l.b16 %v1394
        %v1424 = vunpack.c.l.b16 %v1395
        %v1425 = vunpack.c.l.b16 %v1396
        %v1426 = vunpack.c.l.b16 %v1397
        %v1427 = vunpack.c.l.b16 %v1398
        %v1428 = vunpack.c.l.b16 %v1399
        %v1429 = vunpack.c.l.b16 %v1400
        %v1430 = vunpack.c.l.b16 %v1401
        %v1431 = vpack.c.b16 %v1424, %v1423
        %v1432 = vpack.c.b16 %v1426, %v1425
        %v1433 = vpack.c.b16 %v1428, %v1427
        %v1434 = vpack.c.b16 %v1430, %v1429
        %v1447 = vunpack.c.l.b16 %v1403
        %v1448 = vunpack.c.l.b16 %v1404
        %v1449 = vunpack.c.l.b16 %v1405
        %v1450 = vunpack.c.l.b16 %v1406
        %v1451 = vunpack.c.l.b16 %v1407
        %v1452 = vunpack.c.l.b16 %v1408
        %v1453 = vunpack.c.l.b16 %v1409
        %v1454 = vunpack.c.l.b16 %v1410
        %v1455 = vunpack.c.l.b16 %v1411
        %v1456 = vunpack.c.l.b16 %v1412
        %v1457 = vunpack.c.l.b16 %v1413
        %v1458 = vunpack.c.l.b16 %v1414
        %v1459 = vpack.c.b16 %v1448, %v1447
        %v1460 = vpack.c.b16 %v1450, %v1449
        %v1461 = vpack.c.b16 %v1452, %v1451
        %v1462 = vpack.c.b16 %v1454, %v1453
        %v1463 = vpack.c.b16 %v1456, %v1455
        %v1464 = vpack.c.b16 %v1458, %v1457
        %v1472 = vsel %vm522, %v1431, 0
        %v1475 = vsel %vm522, %v1432, 0
        %v1478 = vsel %vm522, %v1433, 0
        %v1481 = vsel %vm522, %v1434, 0
        %1483 = vmatprep.subr.bf16.mxu0 0
        %1484 = vmatpush1.bf16.msra.mxu0 %v1459
        %1485 = vmatprep.subr.bf16.mxu0 0
        %1486 = vmatpush1.bf16.msra.mxu0 %v1460
        %1487 = vmatprep.subr.bf16.mxu0 0
        %1488 = vmatpush1.bf16.msra.mxu0 %v1461
        %1489 = vmatprep.subr.bf16.mxu0 0
        %1490 = vmatpush1.bf16.msra.mxu0 %v1462
        %1491 = vmatprep.subr.bf16.mxu0 0
        %1492 = vmatpush1.bf16.msra.mxu0 %v1463
        %1493 = vmatprep.subr.bf16.mxu0 0
        %1494 = vmatpush1.bf16.msra.mxu0 %v1464
        %1495 = vmatprep.subr.bf16.mxu0 0
        %1496 = vmatpush1.bf16.msra.mxu0 0
        %1497 = vmatprep.subr.bf16.mxu0 0
        %1498 = vmatpush1.bf16.msra.mxu0 0
        %1499 = vmatprep.subr.bf16.mxu0 0
        %1500 = vmatpush1.bf16.msra.mxu0 0
        %1501 = vmatprep.subr.bf16.mxu0 0
        %1502 = vmatpush1.bf16.msra.mxu0 0
        %1503 = vmatprep.subr.bf16.mxu0 0
        %1504 = vmatpush1.bf16.msra.mxu0 0
        %1505 = vmatprep.subr.bf16.mxu0 0
        %1506 = vmatpush1.bf16.msra.mxu0 0
        %1507 = vmatprep.subr.bf16.mxu0 0
        %1508 = vmatpush1.bf16.msra.mxu0 0
        %1509 = vmatprep.subr.bf16.mxu0 0
        %1510 = vmatpush1.bf16.msra.mxu0 0
        %1511 = vmatprep.subr.bf16.mxu0 0
        %1512 = vmatpush1.bf16.msra.mxu0 0
        %1513 = vmatprep.subr.bf16.mxu0 0
        %1514 = vmatpush1.bf16.msra.mxu0 0
        %1515 = vmatprep.mubr.bf16.mxu0 0
        %1516 = vmatmul.mubr.bf16.gmra.mrb[0].mxu0 %v1472
        %v1517 = vpop.f32.mrb[0].mxu0
        %v1518 = vadd.f32 0.0, %v1517
        %v1519 = vpop.f32.mrb[0].mxu0
        %v1520 = vpop.f32.mrb[0].mxu0
        %v1521 = vadd.f32 0.0, %v1520
        %v1522 = vpop.f32.mrb[0].mxu0
        %1523 = vmatprep.mubr.bf16.mxu0 0
        %1524 = vmatmul.mubr.bf16.gmra.mrb[0].mxu0 %v1475
        %v1525 = vpop.f32.mrb[0].mxu0
        %v1526 = vadd.f32 0.0, %v1525
        %v1527 = vpop.f32.mrb[0].mxu0
        %v1528 = vpop.f32.mrb[0].mxu0
        %v1529 = vadd.f32 0.0, %v1528
        %v1530 = vpop.f32.mrb[0].mxu0
        %1531 = vmatprep.mubr.bf16.mxu0 0
        %1532 = vmatmul.mubr.bf16.gmra.mrb[0].mxu0 %v1478
        %v1533 = vpop.f32.mrb[0].mxu0
        %v1534 = vadd.f32 0.0, %v1533
        %v1535 = vpop.f32.mrb[0].mxu0
        %v1536 = vpop.f32.mrb[0].mxu0
        %v1537 = vadd.f32 0.0, %v1536
        %v1538 = vpop.f32.mrb[0].mxu0
        %1539 = vmatprep.mubr.bf16.mxu0 0
        %1540 = vmatmul.mubr.bf16.gmra.mrb[0].mxu0 %v1481
        %v1541 = vpop.f32.mrb[0].mxu0
        %v1542 = vadd.f32 0.0, %v1541
        %v1543 = vpop.f32.mrb[0].mxu0
        %v1544 = vpop.f32.mrb[0].mxu0
        %v1545 = vadd.f32 0.0, %v1544
        %v1546 = vpop.f32.mrb[0].mxu0
        %1547 = vdwg.mxu0
        %v1548 = vadd.f32 %v1384, %v1518
        %v1549 = vadd.f32 %v1385, %v1521
        %v1550 = vadd.f32 %v1386, %v1526
        %v1551 = vadd.f32 %v1387, %v1529
        %v1552 = vadd.f32 %v1388, %v1534
        %v1553 = vadd.f32 %v1389, %v1537
        %v1554 = vadd.f32 %v1390, %v1542
        %v1555 = vadd.f32 %v1391, %v1545
        %s1556 = smul.addr %s441, 4
        %s1557 = scalar_lea.vmem %s366, %s1556 [#allocation7]
        %v1558 = vld [vmem:[%s1557] sm:$0xf]
        %v1559 = vld [vmem:[%s1557 + $0x4] sm:$0xf]
        %v1560 = vld [vmem:[%s1557 + $0x8] sm:$0xf]
        %v1561 = vld [vmem:[%s1557 + $0xc] sm:$0xf]
        %v1562 = vld [vmem:[%s1557 + $0x10] sm:$0xf]
        %v1563 = vld [vmem:[%s1557 + $0x14] sm:$0xf]
        %v1564 = vld [vmem:[%s1557 + $0x18] sm:$0xf]
        %v1565 = vld [vmem:[%s1557 + $0x1c] sm:$0xf]
        %s1566 = scalar_lea.vmem [#allocation8], 336
        %v1567 = vld [vmem:[%s1566] sm:$0xf]
        %v1568 = vld [vmem:[%s1566 + $0x4] sm:$0xf]
        %v1569 = vld [vmem:[%s1566 + $0x8] sm:$0xf]
        %v1570 = vld [vmem:[%s1566 + $0xc] sm:$0xf]
        %v1571 = vld [vmem:[%s1566 + $0x10] sm:$0xf]
        %v1572 = vld [vmem:[%s1566 + $0x14] sm:$0xf]
        %v1573 = vld [vmem:[%s1566 + $0x18] sm:$0xf]
        %v1574 = vld [vmem:[%s1566 + $0x1c] sm:$0xf]
        %v1575 = vld [vmem:[%s1566 + $0x20] sm:$0xf]
        %v1576 = vld [vmem:[%s1566 + $0x24] sm:$0xf]
        %v1577 = vld [vmem:[%s1566 + $0x28] sm:$0xf]
        %v1578 = vld [vmem:[%s1566 + $0x2c] sm:$0xf]
        %v1587 = vunpack.c.l.b16 %v1558
        %v1588 = vunpack.c.l.b16 %v1559
        %v1589 = vunpack.c.l.b16 %v1560
        %v1590 = vunpack.c.l.b16 %v1561
        %v1591 = vunpack.c.l.b16 %v1562
        %v1592 = vunpack.c.l.b16 %v1563
        %v1593 = vunpack.c.l.b16 %v1564
        %v1594 = vunpack.c.l.b16 %v1565
        %v1595 = vpack.c.b16 %v1588, %v1587
        %v1596 = vpack.c.b16 %v1590, %v1589
        %v1597 = vpack.c.b16 %v1592, %v1591
        %v1598 = vpack.c.b16 %v1594, %v1593
        %v1611 = vunpack.c.l.b16 %v1567
        %v1612 = vunpack.c.l.b16 %v1568
        %v1613 = vunpack.c.l.b16 %v1569
        %v1614 = vunpack.c.l.b16 %v1570
        %v1615 = vunpack.c.l.b16 %v1571
        %v1616 = vunpack.c.l.b16 %v1572
        %v1617 = vunpack.c.l.b16 %v1573
        %v1618 = vunpack.c.l.b16 %v1574
        %v1619 = vunpack.c.l.b16 %v1575
        %v1620 = vunpack.c.l.b16 %v1576
        %v1621 = vunpack.c.l.b16 %v1577
        %v1622 = vunpack.c.l.b16 %v1578
        %v1623 = vpack.c.b16 %v1612, %v1611
        %v1624 = vpack.c.b16 %v1614, %v1613
        %v1625 = vpack.c.b16 %v1616, %v1615
        %v1626 = vpack.c.b16 %v1618, %v1617
        %v1627 = vpack.c.b16 %v1620, %v1619
        %v1628 = vpack.c.b16 %v1622, %v1621
        %v1636 = vsel %vm522, %v1595, 0
        %v1639 = vsel %vm522, %v1596, 0
        %v1642 = vsel %vm522, %v1597, 0
        %v1645 = vsel %vm522, %v1598, 0
        %1647 = vmatprep.subr.bf16.mxu0 0
        %1648 = vmatpush1.bf16.msra.mxu0 %v1623
        %1649 = vmatprep.subr.bf16.mxu0 0
        %1650 = vmatpush1.bf16.msra.mxu0 %v1624
        %1651 = vmatprep.subr.bf16.mxu0 0
        %1652 = vmatpush1.bf16.msra.mxu0 %v1625
        %1653 = vmatprep.subr.bf16.mxu0 0
        %1654 = vmatpush1.bf16.msra.mxu0 %v1626
        %1655 = vmatprep.subr.bf16.mxu0 0
        %1656 = vmatpush1.bf16.msra.mxu0 %v1627
        %1657 = vmatprep.subr.bf16.mxu0 0
        %1658 = vmatpush1.bf16.msra.mxu0 %v1628
        %1659 = vmatprep.subr.bf16.mxu0 0
        %1660 = vmatpush1.bf16.msra.mxu0 0
        %1661 = vmatprep.subr.bf16.mxu0 0
        %1662 = vmatpush1.bf16.msra.mxu0 0
        %1663 = vmatprep.subr.bf16.mxu0 0
        %1664 = vmatpush1.bf16.msra.mxu0 0
        %1665 = vmatprep.subr.bf16.mxu0 0
        %1666 = vmatpush1.bf16.msra.mxu0 0
        %1667 = vmatprep.subr.bf16.mxu0 0
        %1668 = vmatpush1.bf16.msra.mxu0 0
        %1669 = vmatprep.subr.bf16.mxu0 0
        %1670 = vmatpush1.bf16.msra.mxu0 0
        %1671 = vmatprep.subr.bf16.mxu0 0
        %1672 = vmatpush1.bf16.msra.mxu0 0
        %1673 = vmatprep.subr.bf16.mxu0 0
        %1674 = vmatpush1.bf16.msra.mxu0 0
        %1675 = vmatprep.subr.bf16.mxu0 0
        %1676 = vmatpush1.bf16.msra.mxu0 0
        %1677 = vmatprep.subr.bf16.mxu0 0
        %1678 = vmatpush1.bf16.msra.mxu0 0
        %1679 = vmatprep.mubr.bf16.mxu0 0
        %1680 = vmatmul.mubr.bf16.gmra.mrb[0].mxu0 %v1636
        %v1681 = vpop.f32.mrb[0].mxu0
        %v1682 = vadd.f32 0.0, %v1681
        %v1683 = vpop.f32.mrb[0].mxu0
        %v1684 = vpop.f32.mrb[0].mxu0
        %v1685 = vadd.f32 0.0, %v1684
        %v1686 = vpop.f32.mrb[0].mxu0
        %1687 = vmatprep.mubr.bf16.mxu0 0
        %1688 = vmatmul.mubr.bf16.gmra.mrb[0].mxu0 %v1639
        %v1689 = vpop.f32.mrb[0].mxu0
        %v1690 = vadd.f32 0.0, %v1689
        %v1691 = vpop.f32.mrb[0].mxu0
        %v1692 = vpop.f32.mrb[0].mxu0
        %v1693 = vadd.f32 0.0, %v1692
        %v1694 = vpop.f32.mrb[0].mxu0
        %1695 = vmatprep.mubr.bf16.mxu0 0
        %1696 = vmatmul.mubr.bf16.gmra.mrb[0].mxu0 %v1642
        %v1697 = vpop.f32.mrb[0].mxu0
        %v1698 = vadd.f32 0.0, %v1697
        %v1699 = vpop.f32.mrb[0].mxu0
        %v1700 = vpop.f32.mrb[0].mxu0
        %v1701 = vadd.f32 0.0, %v1700
        %v1702 = vpop.f32.mrb[0].mxu0
        %1703 = vmatprep.mubr.bf16.mxu0 0
        %1704 = vmatmul.mubr.bf16.gmra.mrb[0].mxu0 %v1645
        %v1705 = vpop.f32.mrb[0].mxu0
        %v1706 = vadd.f32 0.0, %v1705
        %v1707 = vpop.f32.mrb[0].mxu0
        %v1708 = vpop.f32.mrb[0].mxu0
        %v1709 = vadd.f32 0.0, %v1708
        %v1710 = vpop.f32.mrb[0].mxu0
        %1711 = vdwg.mxu0
        %v1712 = vadd.f32 %v1548, %v1682
        %v1713 = vadd.f32 %v1549, %v1685
        %v1714 = vadd.f32 %v1550, %v1690
        %v1715 = vadd.f32 %v1551, %v1693
        %v1716 = vadd.f32 %v1552, %v1698
        %v1717 = vadd.f32 %v1553, %v1701
        %v1718 = vadd.f32 %v1554, %v1706
        %v1719 = vadd.f32 %v1555, %v1709
        %s1720 = smul.addr %s734, 4
        %s1721 = scalar_lea.vmem %s366, %s1720 [#allocation7]
        %v1722 = vld [vmem:[%s1721] sm:$0xf]
        %v1723 = vld [vmem:[%s1721 + $0x4] sm:$0xf]
        %v1724 = vld [vmem:[%s1721 + $0x8] sm:$0xf]
        %v1725 = vld [vmem:[%s1721 + $0xc] sm:$0xf]
        %v1726 = vld [vmem:[%s1721 + $0x10] sm:$0xf]
        %v1727 = vld [vmem:[%s1721 + $0x14] sm:$0xf]
        %v1728 = vld [vmem:[%s1721 + $0x18] sm:$0xf]
        %v1729 = vld [vmem:[%s1721 + $0x1c] sm:$0xf]
        %s1730 = scalar_lea.vmem [#allocation8], 384
        %v1731 = vld [vmem:[%s1730] sm:$0xf]
        %v1732 = vld [vmem:[%s1730 + $0x4] sm:$0xf]
        %v1733 = vld [vmem:[%s1730 + $0x8] sm:$0xf]
        %v1734 = vld [vmem:[%s1730 + $0xc] sm:$0xf]
        %v1735 = vld [vmem:[%s1730 + $0x10] sm:$0xf]
        %v1736 = vld [vmem:[%s1730 + $0x14] sm:$0xf]
        %v1737 = vld [vmem:[%s1730 + $0x18] sm:$0xf]
        %v1738 = vld [vmem:[%s1730 + $0x1c] sm:$0xf]
        %v1739 = vld [vmem:[%s1730 + $0x20] sm:$0xf]
        %v1740 = vld [vmem:[%s1730 + $0x24] sm:$0xf]
        %v1741 = vld [vmem:[%s1730 + $0x28] sm:$0xf]
        %v1742 = vld [vmem:[%s1730 + $0x2c] sm:$0xf]
        %v1751 = vunpack.c.l.b16 %v1722
        %v1752 = vunpack.c.l.b16 %v1723
        %v1753 = vunpack.c.l.b16 %v1724
        %v1754 = vunpack.c.l.b16 %v1725
        %v1755 = vunpack.c.l.b16 %v1726
        %v1756 = vunpack.c.l.b16 %v1727
        %v1757 = vunpack.c.l.b16 %v1728
        %v1758 = vunpack.c.l.b16 %v1729
        %v1759 = vpack.c.b16 %v1752, %v1751
        %v1760 = vpack.c.b16 %v1754, %v1753
        %v1761 = vpack.c.b16 %v1756, %v1755
        %v1762 = vpack.c.b16 %v1758, %v1757
        %v1775 = vunpack.c.l.b16 %v1731
        %v1776 = vunpack.c.l.b16 %v1732
        %v1777 = vunpack.c.l.b16 %v1733
        %v1778 = vunpack.c.l.b16 %v1734
        %v1779 = vunpack.c.l.b16 %v1735
        %v1780 = vunpack.c.l.b16 %v1736
        %v1781 = vunpack.c.l.b16 %v1737
        %v1782 = vunpack.c.l.b16 %v1738
        %v1783 = vunpack.c.l.b16 %v1739
        %v1784 = vunpack.c.l.b16 %v1740
        %v1785 = vunpack.c.l.b16 %v1741
        %v1786 = vunpack.c.l.b16 %v1742
        %v1787 = vpack.c.b16 %v1776, %v1775
        %v1788 = vpack.c.b16 %v1778, %v1777
        %v1789 = vpack.c.b16 %v1780, %v1779
        %v1790 = vpack.c.b16 %v1782, %v1781
        %v1791 = vpack.c.b16 %v1784, %v1783
        %v1792 = vpack.c.b16 %v1786, %v1785
        %v1800 = vsel %vm522, %v1759, 0
        %v1803 = vsel %vm522, %v1760, 0
        %v1806 = vsel %vm522, %v1761, 0
        %v1809 = vsel %vm522, %v1762, 0
        %1811 = vmatprep.subr.bf16.mxu0 0
        %1812 = vmatpush1.bf16.msra.mxu0 %v1787
        %1813 = vmatprep.subr.bf16.mxu0 0
        %1814 = vmatpush1.bf16.msra.mxu0 %v1788
        %1815 = vmatprep.subr.bf16.mxu0 0
        %1816 = vmatpush1.bf16.msra.mxu0 %v1789
        %1817 = vmatprep.subr.bf16.mxu0 0
        %1818 = vmatpush1.bf16.msra.mxu0 %v1790
        %1819 = vmatprep.subr.bf16.mxu0 0
        %1820 = vmatpush1.bf16.msra.mxu0 %v1791
        %1821 = vmatprep.subr.bf16.mxu0 0
        %1822 = vmatpush1.bf16.msra.mxu0 %v1792
        %1823 = vmatprep.subr.bf16.mxu0 0
        %1824 = vmatpush1.bf16.msra.mxu0 0
        %1825 = vmatprep.subr.bf16.mxu0 0
        %1826 = vmatpush1.bf16.msra.mxu0 0
        %1827 = vmatprep.subr.bf16.mxu0 0
        %1828 = vmatpush1.bf16.msra.mxu0 0
        %1829 = vmatprep.subr.bf16.mxu0 0
        %1830 = vmatpush1.bf16.msra.mxu0 0
        %1831 = vmatprep.subr.bf16.mxu0 0
        %1832 = vmatpush1.bf16.msra.mxu0 0
        %1833 = vmatprep.subr.bf16.mxu0 0
        %1834 = vmatpush1.bf16.msra.mxu0 0
        %1835 = vmatprep.subr.bf16.mxu0 0
        %1836 = vmatpush1.bf16.msra.mxu0 0
        %1837 = vmatprep.subr.bf16.mxu0 0
        %1838 = vmatpush1.bf16.msra.mxu0 0
        %1839 = vmatprep.subr.bf16.mxu0 0
        %1840 = vmatpush1.bf16.msra.mxu0 0
        %1841 = vmatprep.subr.bf16.mxu0 0
        %1842 = vmatpush1.bf16.msra.mxu0 0
        %1843 = vmatprep.mubr.bf16.mxu0 0
        %1844 = vmatmul.mubr.bf16.gmra.mrb[0].mxu0 %v1800
        %v1845 = vpop.f32.mrb[0].mxu0
        %v1846 = vadd.f32 0.0, %v1845
        %v1847 = vpop.f32.mrb[0].mxu0
        %v1848 = vpop.f32.mrb[0].mxu0
        %v1849 = vadd.f32 0.0, %v1848
        %v1850 = vpop.f32.mrb[0].mxu0
        %1851 = vmatprep.mubr.bf16.mxu0 0
        %1852 = vmatmul.mubr.bf16.gmra.mrb[0].mxu0 %v1803
        %v1853 = vpop.f32.mrb[0].mxu0
        %v1854 = vadd.f32 0.0, %v1853
        %v1855 = vpop.f32.mrb[0].mxu0
        %v1856 = vpop.f32.mrb[0].mxu0
        %v1857 = vadd.f32 0.0, %v1856
        %v1858 = vpop.f32.mrb[0].mxu0
        %1859 = vmatprep.mubr.bf16.mxu0 0
        %1860 = vmatmul.mubr.bf16.gmra.mrb[0].mxu0 %v1806
        %v1861 = vpop.f32.mrb[0].mxu0
        %v1862 = vadd.f32 0.0, %v1861
        %v1863 = vpop.f32.mrb[0].mxu0
        %v1864 = vpop.f32.mrb[0].mxu0
        %v1865 = vadd.f32 0.0, %v1864
        %v1866 = vpop.f32.mrb[0].mxu0
        %1867 = vmatprep.mubr.bf16.mxu0 0
        %1868 = vmatmul.mubr.bf16.gmra.mrb[0].mxu0 %v1809
        %v1869 = vpop.f32.mrb[0].mxu0
        %v1870 = vadd.f32 0.0, %v1869
        %v1871 = vpop.f32.mrb[0].mxu0
        %v1872 = vpop.f32.mrb[0].mxu0
        %v1873 = vadd.f32 0.0, %v1872
        %v1874 = vpop.f32.mrb[0].mxu0
        %1875 = vdwg.mxu0
        %v1876 = vadd.f32 %v1712, %v1846
        %v1877 = vadd.f32 %v1713, %v1849
        %v1878 = vadd.f32 %v1714, %v1854
        %v1879 = vadd.f32 %v1715, %v1857
        %v1880 = vadd.f32 %v1716, %v1862
        %v1881 = vadd.f32 %v1717, %v1865
        %v1882 = vadd.f32 %v1718, %v1870
        %v1883 = vadd.f32 %v1719, %v1873
        %v1884 = vld [vmem:[#allocation10] sm:$0x1]
        %v1886 = vlaneseq
        %v1887 = vshrl.u32 %v1886, 7
        %v1888 = vsub.s32 0, %v1887
        %v1889 = vrot.slane %v1884, %v1888
        %v1891 = vadd.f32 %v1876, %v1889
        %v1892 = vadd.f32 %v1877, %v1889
        %v1893 = vadd.f32 %v1878, %v1889
        %v1894 = vadd.f32 %v1879, %v1889
        %v1895 = vadd.f32 %v1880, %v1889
        %v1896 = vadd.f32 %v1881, %v1889
        %v1897 = vadd.f32 %v1882, %v1889
        %v1898 = vadd.f32 %v1883, %v1889
        %v1899 = vmax.f32 %v1891, 0.0
        %v1900 = vmax.f32 %v1892, 0.0
        %v1901 = vmax.f32 %v1893, 0.0
        %v1902 = vmax.f32 %v1894, 0.0
        %v1903 = vmax.f32 %v1895, 0.0
        %v1904 = vmax.f32 %v1896, 0.0
        %v1905 = vmax.f32 %v1897, 0.0
        %v1906 = vmax.f32 %v1898, 0.0
        %v1907 = vpack.c.bf16 %v1900, %v1899
        %v1908 = vpack.c.bf16 %v1902, %v1901
        %v1909 = vpack.c.bf16 %v1904, %v1903
        %v1910 = vpack.c.bf16 %v1906, %v1905
        %v1915 = vunpack.c.l.b16 %v1907
        %v1916 = vunpack.c.h.b16 %v1907
        %v1917 = vunpack.c.l.b16 %v1908
        %v1918 = vunpack.c.h.b16 %v1908
        %v1919 = vunpack.c.l.b16 %v1909
        %v1920 = vunpack.c.h.b16 %v1909
        %v1921 = vunpack.c.l.b16 %v1910
        %v1922 = vunpack.c.h.b16 %v1910
        %v1923 = vpack.c.b16 %v1915, %v1915
        %v1924 = vpack.c.b16 %v1916, %v1916
        %v1925 = vpack.c.b16 %v1917, %v1917
        %v1926 = vpack.c.b16 %v1918, %v1918
        %v1927 = vpack.c.b16 %v1919, %v1919
        %v1928 = vpack.c.b16 %v1920, %v1920
        %v1929 = vpack.c.b16 %v1921, %v1921
        %v1930 = vpack.c.b16 %v1922, %v1922
        %vm1939 = vcmask 519168
        %1940 = vst.msk [vmem:[%s410] sm:$0xf] %vm1939, %v1923
        %1941 = vst.msk [vmem:[%s410 + $0x4] sm:$0xf] %vm1939, %v1924
        %1942 = vst.msk [vmem:[%s410 + $0x8] sm:$0xf] %vm1939, %v1925
        %1943 = vst.msk [vmem:[%s410 + $0xc] sm:$0xf] %vm1939, %v1926
        %1944 = vst.msk [vmem:[%s410 + $0x10] sm:$0xf] %vm1939, %v1927
        %1945 = vst.msk [vmem:[%s410 + $0x14] sm:$0xf] %vm1939, %v1928
        %1946 = vst.msk [vmem:[%s410 + $0x18] sm:$0xf] %vm1939, %v1929
        %1947 = vst.msk [vmem:[%s410 + $0x1c] sm:$0xf] %vm1939, %v1930
        %s1948 = sand.u32 %s206, 1
        %s1949 = scalar_lea.sflag [#allocation4], %s1948
        %s1950 = sand.u32 %s206, 1
        %s1951 = smul.addr %s1950, 32
        %s1952 = scalar_lea.vmem [#allocation11], %s1951
        // Predicated region
        $region61: #{tpu_custom_call.1} parent=39 // pred_check
          %p1953 = pneg %p216
        $region62: #{tpu_custom_call.1} parent=39 // pred_check_branch
          %1955 = sbr.rel (%p1953) target = $region64
        $region63: #{tpu_custom_call.1} parent=39 // pred_region
          %s1956 = smul.u32 8, %s35
          %s1958 = ssub.s32 512, 512
          %1959 = vsyncadd %s1949, %s1958
          %s1960 = sadd.s32 %s33, %s1956
          %s1961 = smul.addr %s34, 8
          %s1962 = sadd.s32 %s1960, %s1961
          %s1963 = smul.addr %s32, 16
          %s1964 = sadd.s32 %s1962, %s1963
          %s1965 = smul.addr %s1964, 64
          %s1966 = scalar_lea.hbm %s5, %s1965
          %s1967 = sshll.u32 %s1952, 4
          %s1968 = int_to_ptr.vmem [resolvable:$true] %s1967
          %1973 = dma.vmem_to_hbm [thread:$0]  %s1968, 512, %s1966, %s1949, 64, 64, 4
        $region64: #{tpu_custom_call.1} parent=39 // pred_fallthru
          _
      $region40: #{tpu_custom_call.1} parent=5 // pred_fallthru
        _
      %p1974 = scmp.le.s32.totalorder 2, %s21
      // Predicated region
      $region65: #{tpu_custom_call.1} parent=5 // pred_check
        %p1975 = pneg %p1974
      $region66: #{tpu_custom_call.1} parent=5 // pred_check_branch
        %1977 = sbr.rel (%p1975) target = $region68
      $region67: #{tpu_custom_call.1} parent=5 // pred_region
        %s1978 = ssub.s32 %s21, 2
        // Predicated region
        $region69: #{tpu_custom_call.1} parent=67 // pred_check
          %p1979 = pneg %p222
        $region70: #{tpu_custom_call.1} parent=67 // pred_check_branch
          %1981 = sbr.rel (%p1979) target = $region72
        $region71: #{tpu_custom_call.1} parent=67 // pred_region
          %s1982 = sand.u32 %s207, 1
          %s1983 = scalar_lea.sflag [#allocation4], %s1982
          %s1984 = sand.u32 %s207, 1
          %s1985 = smul.addr %s1984, 32
          %s1986 = scalar_lea.vmem [#allocation11], %s1985
          %1987 = dma.done %s1983, 512
        $region72: #{tpu_custom_call.1} parent=67 // pred_fallthru
          _
      $region68: #{tpu_custom_call.1} parent=5 // pred_fallthru
        _
    $region6: #{tpu_custom_call.1} parent=1 // loop_footer
      %s25 = sadd.s32 1, %s21
    $region7: #{tpu_custom_call.1} parent=1 // loop_footer_branch
      %20 = sbr.rel target = $region3
    $region8: #{tpu_custom_call.1} parent=1 // loop_exit
      _
    %1988 = vsyncpa [#allocation3], 1
    %s1989 = scalar_lea.sflag [#allocation3], 1
    %1990 = vsyncpa %s1989, 1
    %1991 = vsyncpa [#allocation6], 1
    %s1992 = scalar_lea.sflag [#allocation6], 1
    %1993 = vsyncpa %s1992, 1
    %1994 = vsyncpa [#allocation9], 1
    %1995 = vsyncpa [#allocation4], 1
    %s1996 = scalar_lea.sflag [#allocation4], 1
    %1997 = vsyncpa %s1996, 1

</llo_original>
